<compile_context>
chip_gen: v7x
topology: tpu7x:2x2x1
jax: 0.10.0
libtpu: 0.0.40
codegen_flags: <defaults>
</compile_context>

<pallas_src>
import math
import functools

import jax
import jax.numpy as jnp
from jax import lax
from jax.experimental import pallas as pl
from jax.experimental.pallas import tpu as pltpu

# ---------------- configuration (matches __init__ args) ----------------
MODE = "LSTM"
INPUT_SIZE = 16
HIDDEN_SIZE = 32
NUM_LAYERS = 1
BATCH = 8            # multiple of 8 -> sublane-dense vregs / stores
SEQ = 8
LOG_SIGMA1 = -1.0
LOG_SIGMA2 = -7.0
PRIOR_PI = 0.25

_SIGMA1 = math.exp(LOG_SIGMA1)
_SIGMA2 = math.exp(LOG_SIGMA2)
_SIGMA_MIX = math.sqrt(PRIOR_PI * _SIGMA1 ** 2 + (1.0 - PRIOR_PI) * _SIGMA2 ** 2)
_RHO_MAX_INIT = math.log(math.exp(_SIGMA_MIX / 2.0) - 1.0)
_RHO_MIN_INIT = math.log(math.exp(_SIGMA_MIX / 4.0) - 1.0)
_LOG_2PI = math.log(2.0 * math.pi)


# ---------------- numerically-stable helpers (kernel-safe) ------------------
def _stable_softplus(x):
    # softplus(x) = max(x,0) + log(1 + exp(-|x|))   (one exp, no overflow)
    return jnp.maximum(x, 0.0) + jnp.log(1.0 + jnp.exp(-jnp.abs(x)))


def _sample_and_kl(mu, rho, eps, *, sigma1, sigma2, prior_pi):
    """BBB sample w = mu + eps*(softplus(rho)+1e-5) plus sampled-KL term.

    TODO(synk): compute_KL source not provided in the spec; standard BBB
    sampled KL (log q(w|mu,sigma) - log scale-mixture prior) implemented.
    The -0.5*log(2*pi) constants cancel between log_q and log_p and are
    dropped; the mixture logaddexp uses the one-exp form.
    """
    sigma = _stable_softplus(rho) + 1e-5
    w = mu + eps * sigma
    # log q(w | mu, sigma) (constant dropped); (w - mu)/sigma == eps exactly.
    log_q = -jnp.log(sigma) - 0.5 * eps * eps

    inv_s1 = 1.0 / sigma1
    inv_s2 = 1.0 / sigma2
    a = math.log(prior_pi) - math.log(sigma1) - 0.5 * (w * inv_s1) ** 2
    b = math.log(1.0 - prior_pi) - math.log(sigma2) - 0.5 * (w * inv_s2) ** 2
    # one-exp logaddexp: max(a,b) + log(1 + exp(-|a-b|))
    log_p = jnp.maximum(a, b) + jnp.log(1.0 + jnp.exp(-jnp.abs(a - b)))
    return w, jnp.sum(log_q - log_p, keepdims=True)          # (1, 1)


# ---------------- fused kernel: sampling + KL + input proj + recurrence -----
def _bayes_lstm_kernel(x_ref,                                  # (T*B, I)  f32
                       mu_ih_ref, rho_ih_ref, eps_ih_ref,      # (I, 4H)   f32
                       mu_hh_ref, rho_hh_ref, eps_hh_ref,      # (H, 4H)   f32
                       b_ih_ref, b_hh_ref,                     # (1, 4H)   f32
                       out_ref,                                # (T*B, H)  f32
                       hn_ref, cn_ref,                         # (B, H)    f32
                       kl_ref,                                 # (1, 1)    f32
                       *, seq_len, batch, hidden,
                       sigma1, sigma2, prior_pi):
    T, B, H = seq_len, batch, hidden

    # --- 1) Bayes-by-Backprop sampling + sampled KL, all f32 (VPU/EUP) ------
    w_ih_t, kl_ih = _sample_and_kl(mu_ih_ref[...], rho_ih_ref[...],
                                   eps_ih_ref[...], sigma1=sigma1,
                                   sigma2=sigma2, prior_pi=prior_pi)
    w_hh_t, kl_hh = _sample_and_kl(mu_hh_ref[...], rho_hh_ref[...],
                                   eps_hh_ref[...], sigma1=sigma1,
                                   sigma2=sigma2, prior_pi=prior_pi)
    kl_ref[...] = kl_ih + kl_hh        # self.kl = KL(ih); self.kl += KL(hh)

    # bf16 MXU operands (KL above already consumed the f32 samples)
    w_ih_bf = w_ih_t.astype(jnp.bfloat16)          # (I, 4H)
    w_hh_bf = w_hh_t.astype(jnp.bfloat16)          # (H, 4H)

    # --- 2) hoisted input projection, kept register-resident (no scratch) ---
    bias = b_ih_ref[...] + b_hh_ref[...]                        # (1, 4H) f32
    gates_x = jnp.dot(x_ref[...].astype(jnp.bfloat16), w_ih_bf,
                      preferred_element_type=jnp.float32) + bias  # (T*B, 4H)

    # --- 3) recurrence: only h @ W_hh^T per step, statically unrolled -------
    h = jnp.zeros((B, H), jnp.float32)
    c = jnp.zeros((B, H), jnp.float32)
    for t in range(T):                         # static unroll; all indices
        row = t * B                            # below are compile-time consts
        gates = gates_x[row:row + B, :] + jnp.dot(
            h.astype(jnp.bfloat16), w_hh_bf,
            preferred_element_type=jnp.float32)                 # (B, 4H) f32
        # two full-vreg transcendental pushes, then slice gate lanes
        sig = jax.nn.sigmoid(gates)
        th = jnp.tanh(gates)
        i_g = sig[:, 0 * H:1 * H]
        f_g = sig[:, 1 * H:2 * H]
        g_g = th[:, 2 * H:3 * H]
        o_g = sig[:, 3 * H:4 * H]
        c = f_g * c + i_g * g_g
        h = o_g * jnp.tanh(c)
        out_ref[row:row + B, :] = h            # B=8 -> sublane-dense store

    hn_ref[...] = h
    cn_ref[...] = c


# ---------------- forward (BayesRNNBase.forward, var_mode='BBB') ------------
@jax.jit
def bayes_rnn_forward(x, params_t, eps_ih_t, eps_hh_t):
    """Returns (output, (h_n, c_n)), kl — mirrors the PyTorch forward.

    `params_t` / `eps_*_t` are already laid out as (in_dim, 4H) and (1, 4H);
    the transposes are done once at init time, not per forward.
    """
    w_ih_mu_t, w_ih_rho_t, w_hh_mu_t, w_hh_rho_t, b_ih2, b_hh2 = params_t
    T, B, I = x.shape
    H = HIDDEN_SIZE
    G = 4 * H

    kernel = functools.partial(
        _bayes_lstm_kernel, seq_len=T, batch=B, hidden=H,
        sigma1=_SIGMA1, sigma2=_SIGMA2, prior_pi=PRIOR_PI)

    cost = pl.CostEstimate(
        flops=2 * T * B * I * G + 2 * T * B * H * G + 10 * (I + H) * G,
        transcendentals=4 * (I + H) * G + T * B * 9 * H,
        bytes_accessed=4 * (T * B * I + 3 * (I + H) * G + 2 * G
                            + T * B * H + 2 * B * H + 1))

    out_flat, h_n, c_n, kl = pl.pallas_call(
        kernel,
        out_shape=(jax.ShapeDtypeStruct((T * B, H), jnp.float32),
                   jax.ShapeDtypeStruct((B, H), jnp.float32),
                   jax.ShapeDtypeStruct((B, H), jnp.float32),
                   jax.ShapeDtypeStruct((1, 1), jnp.float32)),
        cost_estimate=cost,
    )(x.reshape(T * B, I),
      w_ih_mu_t, w_ih_rho_t, eps_ih_t,
      w_hh_mu_t, w_hh_rho_t, eps_hh_t,
      b_ih2, b_hh2)

    output = out_flat.reshape(T, B, H)
    hidden = (h_n[None], c_n[None])          # (num_layers*num_dirs=1, B, H)
    return (output, hidden), kl[0, 0]


# ---------------- pure-JAX reference for the sanity check -------------------
def _ref_forward(x, params, eps_ih, eps_hh):
    w_ih_mu, w_ih_rho, w_hh_mu, w_hh_rho, b_ih, b_hh = params
    H = HIDDEN_SIZE
    sig_ih = jax.nn.softplus(w_ih_rho) + 1e-5
    sig_hh = jax.nn.softplus(w_hh_rho) + 1e-5
    w_ih = w_ih_mu + eps_ih * sig_ih
    w_hh = w_hh_mu + eps_hh * sig_hh

    def kl_term(w, mu, sigma):
        log_q = -0.5 * _LOG_2PI - jnp.log(sigma) - 0.5 * ((w - mu) / sigma) ** 2

        def log_normal(v, s):
            return -0.5 * _LOG_2PI - math.log(s) - 0.5 * (v / s) ** 2

        log_p = jnp.logaddexp(math.log(PRIOR_PI) + log_normal(w, _SIGMA1),
                              math.log(1.0 - PRIOR_PI) + log_normal(w, _SIGMA2))
        return jnp.sum(log_q - log_p)

    kl = kl_term(w_ih, w_ih_mu, sig_ih) + kl_term(w_hh, w_hh_mu, sig_hh)

    def step(carry, x_t):
        h, c = carry
        gates = x_t @ w_ih.T + b_ih + h @ w_hh.T + b_hh
        i_g = jax.nn.sigmoid(gates[:, :H])
        f_g = jax.nn.sigmoid(gates[:, H:2 * H])
        g_g = jnp.tanh(gates[:, 2 * H:3 * H])
        o_g = jax.nn.sigmoid(gates[:, 3 * H:])
        c = f_g * c + i_g * g_g
        h = o_g * jnp.tanh(c)
        return (h, c), h

    B = x.shape[1]
    init = (jnp.zeros((B, H), jnp.float32), jnp.zeros((B, H), jnp.float32))
    (h, c), ys = jax.lax.scan(step, init, x)
    return ys, h, c, kl


if __name__ == "__main__":
    key = jax.random.PRNGKey(0)
    k_mu_ih, k_rho_ih, k_mu_hh, k_rho_hh, k_x, k_eps = jax.random.split(key, 6)

    G = 4 * HIDDEN_SIZE
    initrange = 0.05
    # reset_parameters(): mu ~ U(-0.05, 0.05), rho ~ U(rho_min, rho_max), bias=0
    w_ih_mu = jax.random.uniform(k_mu_ih, (G, INPUT_SIZE), jnp.float32,
                                 -initrange, initrange)
    w_ih_rho = jax.random.uniform(k_rho_ih, (G, INPUT_SIZE), jnp.float32,
                                  _RHO_MIN_INIT, _RHO_MAX_INIT)
    w_hh_mu = jax.random.uniform(k_mu_hh, (G, HIDDEN_SIZE), jnp.float32,
                                 -initrange, initrange)
    w_hh_rho = jax.random.uniform(k_rho_hh, (G, HIDDEN_SIZE), jnp.float32,
                                  _RHO_MIN_INIT, _RHO_MAX_INIT)
    b_ih = jnp.zeros((G,), jnp.float32)
    b_hh = jnp.zeros((G,), jnp.float32)
    params = (w_ih_mu, w_ih_rho, w_hh_mu, w_hh_rho, b_ih, b_hh)

    x = jax.random.normal(k_x, (SEQ, BATCH, INPUT_SIZE), dtype=jnp.float32)

    # eps drawn per-forward with the shape of the means (module semantics)
    k_ih, k_hh = jax.random.split(k_eps)
    eps_ih = jax.random.normal(k_ih, (G, INPUT_SIZE), dtype=jnp.float32)
    eps_hh = jax.random.normal(k_hh, (G, HIDDEN_SIZE), dtype=jnp.float32)

    # one-time (init) layout plumbing: present everything as (in_dim, 4H) /
    # (1, 4H) so the jitted forward has no transposes in the hot path.
    params_t = (w_ih_mu.T, w_ih_rho.T, w_hh_mu.T, w_hh_rho.T,
                b_ih.reshape(1, G), b_hh.reshape(1, G))
    eps_ih_t = eps_ih.T
    eps_hh_t = eps_hh.T
    params_t, eps_ih_t, eps_hh_t = jax.block_until_ready(
        (params_t, eps_ih_t, eps_hh_t))

    (output, (h_n, c_n)), kl = bayes_rnn_forward(x, params_t, eps_ih_t, eps_hh_t)
    jax.block_until_ready((output, h_n, c_n, kl))

    # sanity check against a pure-JAX reference using the same sampled weights
    ref_out, ref_h, ref_c, ref_kl = _ref_forward(x, params, eps_ih, eps_hh)
    assert output.shape == (SEQ, BATCH, HIDDEN_SIZE)
    assert h_n.shape == (1, BATCH, HIDDEN_SIZE)
    assert c_n.shape == (1, BATCH, HIDDEN_SIZE)
    assert bool(jnp.isfinite(kl))
    assert bool(jnp.allclose(output, ref_out, atol=2e-2, rtol=2e-2))
    assert bool(jnp.allclose(h_n[0], ref_h, atol=2e-2, rtol=2e-2))
    assert bool(jnp.allclose(c_n[0], ref_c, atol=2e-2, rtol=2e-2))
    assert bool(jnp.allclose(kl, ref_kl, rtol=1e-3, atol=1.0))

    print("KERNEL_OK")
</pallas_src>

<mosaic_0001>
module attributes {stable_mosaic.version = 11 : i64} {
  func.func @_bayes_lstm_kernel(%arg0: memref<64x16xf32, #tpu.memory_space<vmem>>, %arg1: memref<16x128xf32, #tpu.memory_space<vmem>>, %arg2: memref<16x128xf32, #tpu.memory_space<vmem>>, %arg3: memref<16x128xf32, #tpu.memory_space<vmem>>, %arg4: memref<32x128xf32, #tpu.memory_space<vmem>>, %arg5: memref<32x128xf32, #tpu.memory_space<vmem>>, %arg6: memref<32x128xf32, #tpu.memory_space<vmem>>, %arg7: memref<1x128xf32, #tpu.memory_space<vmem>>, %arg8: memref<1x128xf32, #tpu.memory_space<vmem>>, %arg9: memref<64x32xf32, #tpu.memory_space<vmem>>, %arg10: memref<8x32xf32, #tpu.memory_space<vmem>>, %arg11: memref<8x32xf32, #tpu.memory_space<vmem>>, %arg12: memref<1x1xf32, #tpu.memory_space<vmem>>) attributes {dimension_semantics = [], scalar_prefetch = 0 : i64, scratch_operands = 0 : i64, tpu.core_type = #tpu.core_type<tc>} {
    %c0 = arith.constant 0 : index
    %c0_0 = arith.constant 0 : index
    %0 = vector.load %arg1[%c0, %c0_0] : memref<16x128xf32, #tpu.memory_space<vmem>>, vector<16x128xf32>
    %c0_1 = arith.constant 0 : index
    %c0_2 = arith.constant 0 : index
    %1 = vector.load %arg2[%c0_1, %c0_2] : memref<16x128xf32, #tpu.memory_space<vmem>>, vector<16x128xf32>
    %c0_3 = arith.constant 0 : index
    %c0_4 = arith.constant 0 : index
    %2 = vector.load %arg3[%c0_3, %c0_4] : memref<16x128xf32, #tpu.memory_space<vmem>>, vector<16x128xf32>
    %cst = arith.constant 0.000000e+00 : f32
    %3 = vector.broadcast %cst : f32 to vector<16x128xf32>
    %4 = arith.maximumf %1, %3 : vector<16x128xf32>
    %5 = math.absf %1 : vector<16x128xf32>
    %cst_5 = arith.constant 0.000000e+00 : f32
    %6 = vector.broadcast %cst_5 : f32 to vector<16x128xf32>
    %7 = arith.subf %6, %5 : vector<16x128xf32>
    %8 = math.exp %7 : vector<16x128xf32>
    %cst_6 = arith.constant 1.000000e+00 : f32
    %9 = vector.broadcast %cst_6 : f32 to vector<16x128xf32>
    %10 = arith.addf %9, %8 : vector<16x128xf32>
    %11 = math.log %10 : vector<16x128xf32>
    %12 = arith.addf %4, %11 : vector<16x128xf32>
    %cst_7 = arith.constant 9.99999974E-6 : f32
    %13 = vector.broadcast %cst_7 : f32 to vector<16x128xf32>
    %14 = arith.addf %12, %13 : vector<16x128xf32>
    %15 = arith.mulf %2, %14 : vector<16x128xf32>
    %16 = arith.addf %0, %15 : vector<16x128xf32>
    %17 = math.log %14 : vector<16x128xf32>
    %cst_8 = arith.constant 0.000000e+00 : f32
    %18 = vector.broadcast %cst_8 : f32 to vector<16x128xf32>
    %19 = arith.subf %18, %17 : vector<16x128xf32>
    %cst_9 = arith.constant 5.000000e-01 : f32
    %20 = vector.broadcast %cst_9 : f32 to vector<16x128xf32>
    %21 = arith.mulf %20, %2 : vector<16x128xf32>
    %22 = arith.mulf %21, %2 : vector<16x128xf32>
    %23 = arith.subf %19, %22 : vector<16x128xf32>
    %cst_10 = arith.constant 2.71828175 : f32
    %24 = vector.broadcast %cst_10 : f32 to vector<16x128xf32>
    %25 = arith.mulf %16, %24 : vector<16x128xf32>
    %26 = arith.mulf %25, %25 : vector<16x128xf32>
    %cst_11 = arith.constant 5.000000e-01 : f32
    %27 = vector.broadcast %cst_11 : f32 to vector<16x128xf32>
    %28 = arith.mulf %27, %26 : vector<16x128xf32>
    %cst_12 = arith.constant -0.386294365 : f32
    %29 = vector.broadcast %cst_12 : f32 to vector<16x128xf32>
    %30 = arith.subf %29, %28 : vector<16x128xf32>
    %cst_13 = arith.constant 1096.63318 : f32
    %31 = vector.broadcast %cst_13 : f32 to vector<16x128xf32>
    %32 = arith.mulf %16, %31 : vector<16x128xf32>
    %33 = arith.mulf %32, %32 : vector<16x128xf32>
    %cst_14 = arith.constant 5.000000e-01 : f32
    %34 = vector.broadcast %cst_14 : f32 to vector<16x128xf32>
    %35 = arith.mulf %34, %33 : vector<16x128xf32>
    %cst_15 = arith.constant 6.71231794 : f32
    %36 = vector.broadcast %cst_15 : f32 to vector<16x128xf32>
    %37 = arith.subf %36, %35 : vector<16x128xf32>
    %38 = arith.maximumf %30, %37 : vector<16x128xf32>
    %39 = arith.subf %30, %37 : vector<16x128xf32>
    %40 = math.absf %39 : vector<16x128xf32>
    %cst_16 = arith.constant 0.000000e+00 : f32
    %41 = vector.broadcast %cst_16 : f32 to vector<16x128xf32>
    %42 = arith.subf %41, %40 : vector<16x128xf32>
    %43 = math.exp %42 : vector<16x128xf32>
    %cst_17 = arith.constant 1.000000e+00 : f32
    %44 = vector.broadcast %cst_17 : f32 to vector<16x128xf32>
    %45 = arith.addf %44, %43 : vector<16x128xf32>
    %46 = math.log %45 : vector<16x128xf32>
    %47 = arith.addf %38, %46 : vector<16x128xf32>
    %48 = arith.subf %23, %47 : vector<16x128xf32>
    %49 = vector.shape_cast %48 : vector<16x128xf32> to vector<1x16x128xf32>
    %cst_18 = arith.constant dense<0.000000e+00> : vector<1xf32>
    %50 = vector.multi_reduction <add>, %49, %cst_18 [1, 2] : vector<1x16x128xf32> to vector<1xf32>
    %51 = vector.shape_cast %50 : vector<1xf32> to vector<1x1x1xf32>
    %52 = vector.extract %51[0, 0, 0] : f32 from vector<1x1x1xf32>
    %53 = vector.broadcast %52 : f32 to vector<1x1xf32>
    %c0_19 = arith.constant 0 : index
    %c0_20 = arith.constant 0 : index
    %54 = vector.load %arg4[%c0_19, %c0_20] : memref<32x128xf32, #tpu.memory_space<vmem>>, vector<32x128xf32>
    %c0_21 = arith.constant 0 : index
    %c0_22 = arith.constant 0 : index
    %55 = vector.load %arg5[%c0_21, %c0_22] : memref<32x128xf32, #tpu.memory_space<vmem>>, vector<32x128xf32>
    %c0_23 = arith.constant 0 : index
    %c0_24 = arith.constant 0 : index
    %56 = vector.load %arg6[%c0_23, %c0_24] : memref<32x128xf32, #tpu.memory_space<vmem>>, vector<32x128xf32>
    %cst_25 = arith.constant 0.000000e+00 : f32
    %57 = vector.broadcast %cst_25 : f32 to vector<32x128xf32>
    %58 = arith.maximumf %55, %57 : vector<32x128xf32>
    %59 = math.absf %55 : vector<32x128xf32>
    %cst_26 = arith.constant 0.000000e+00 : f32
    %60 = vector.broadcast %cst_26 : f32 to vector<32x128xf32>
    %61 = arith.subf %60, %59 : vector<32x128xf32>
    %62 = math.exp %61 : vector<32x128xf32>
    %cst_27 = arith.constant 1.000000e+00 : f32
    %63 = vector.broadcast %cst_27 : f32 to vector<32x128xf32>
    %64 = arith.addf %63, %62 : vector<32x128xf32>
    %65 = math.log %64 : vector<32x128xf32>
    %66 = arith.addf %58, %65 : vector<32x128xf32>
    %cst_28 = arith.constant 9.99999974E-6 : f32
    %67 = vector.broadcast %cst_28 : f32 to vector<32x128xf32>
    %68 = arith.addf %66, %67 : vector<32x128xf32>
    %69 = arith.mulf %56, %68 : vector<32x128xf32>
    %70 = arith.addf %54, %69 : vector<32x128xf32>
    %71 = math.log %68 : vector<32x128xf32>
    %cst_29 = arith.constant 0.000000e+00 : f32
    %72 = vector.broadcast %cst_29 : f32 to vector<32x128xf32>
    %73 = arith.subf %72, %71 : vector<32x128xf32>
    %cst_30 = arith.constant 5.000000e-01 : f32
    %74 = vector.broadcast %cst_30 : f32 to vector<32x128xf32>
    %75 = arith.mulf %74, %56 : vector<32x128xf32>
    %76 = arith.mulf %75, %56 : vector<32x128xf32>
    %77 = arith.subf %73, %76 : vector<32x128xf32>
    %cst_31 = arith.constant 2.71828175 : f32
    %78 = vector.broadcast %cst_31 : f32 to vector<32x128xf32>
    %79 = arith.mulf %70, %78 : vector<32x128xf32>
    %80 = arith.mulf %79, %79 : vector<32x128xf32>
    %cst_32 = arith.constant 5.000000e-01 : f32
    %81 = vector.broadcast %cst_32 : f32 to vector<32x128xf32>
    %82 = arith.mulf %81, %80 : vector<32x128xf32>
    %cst_33 = arith.constant -0.386294365 : f32
    %83 = vector.broadcast %cst_33 : f32 to vector<32x128xf32>
    %84 = arith.subf %83, %82 : vector<32x128xf32>
    %cst_34 = arith.constant 1096.63318 : f32
    %85 = vector.broadcast %cst_34 : f32 to vector<32x128xf32>
    %86 = arith.mulf %70, %85 : vector<32x128xf32>
    %87 = arith.mulf %86, %86 : vector<32x128xf32>
    %cst_35 = arith.constant 5.000000e-01 : f32
    %88 = vector.broadcast %cst_35 : f32 to vector<32x128xf32>
    %89 = arith.mulf %88, %87 : vector<32x128xf32>
    %cst_36 = arith.constant 6.71231794 : f32
    %90 = vector.broadcast %cst_36 : f32 to vector<32x128xf32>
    %91 = arith.subf %90, %89 : vector<32x128xf32>
    %92 = arith.maximumf %84, %91 : vector<32x128xf32>
    %93 = arith.subf %84, %91 : vector<32x128xf32>
    %94 = math.absf %93 : vector<32x128xf32>
    %cst_37 = arith.constant 0.000000e+00 : f32
    %95 = vector.broadcast %cst_37 : f32 to vector<32x128xf32>
    %96 = arith.subf %95, %94 : vector<32x128xf32>
    %97 = math.exp %96 : vector<32x128xf32>
    %cst_38 = arith.constant 1.000000e+00 : f32
    %98 = vector.broadcast %cst_38 : f32 to vector<32x128xf32>
    %99 = arith.addf %98, %97 : vector<32x128xf32>
    %100 = math.log %99 : vector<32x128xf32>
    %101 = arith.addf %92, %100 : vector<32x128xf32>
    %102 = arith.subf %77, %101 : vector<32x128xf32>
    %103 = vector.shape_cast %102 : vector<32x128xf32> to vector<1x32x128xf32>
    %cst_39 = arith.constant dense<0.000000e+00> : vector<1xf32>
    %104 = vector.multi_reduction <add>, %103, %cst_39 [1, 2] : vector<1x32x128xf32> to vector<1xf32>
    %105 = vector.shape_cast %104 : vector<1xf32> to vector<1x1x1xf32>
    %106 = vector.extract %105[0, 0, 0] : f32 from vector<1x1x1xf32>
    %107 = vector.broadcast %106 : f32 to vector<1x1xf32>
    %108 = arith.addf %53, %107 : vector<1x1xf32>
    %c0_40 = arith.constant 0 : index
    %c0_41 = arith.constant 0 : index
    %109 = vector.load %arg12[%c0_40, %c0_41] : memref<1x1xf32, #tpu.memory_space<vmem>>, vector<1x1xf32>
    tpu.vector_store %arg12[%c0_40, %c0_41], %108 {strides = array<i32>} : memref<1x1xf32, #tpu.memory_space<vmem>>, vector<1x1xf32>,
    %110 = arith.truncf %16 : vector<16x128xf32> to vector<16x128xbf16>
    %111 = arith.truncf %70 : vector<32x128xf32> to vector<32x128xbf16>
    %c0_42 = arith.constant 0 : index
    %c0_43 = arith.constant 0 : index
    %112 = vector.load %arg7[%c0_42, %c0_43] : memref<1x128xf32, #tpu.memory_space<vmem>>, vector<1x128xf32>
    %c0_44 = arith.constant 0 : index
    %c0_45 = arith.constant 0 : index
    %113 = vector.load %arg8[%c0_44, %c0_45] : memref<1x128xf32, #tpu.memory_space<vmem>>, vector<1x128xf32>
    %114 = arith.addf %112, %113 : vector<1x128xf32>
    %c0_46 = arith.constant 0 : index
    %c0_47 = arith.constant 0 : index
    %115 = vector.load %arg0[%c0_46, %c0_47] : memref<64x16xf32, #tpu.memory_space<vmem>>, vector<64x16xf32>
    %116 = arith.truncf %115 : vector<64x16xf32> to vector<64x16xbf16>
    %cst_48 = arith.constant dense<0.000000e+00> : vector<64x128xf32>
    %117 = tpu.matmul %116, %110, %cst_48 {dimension_numbers = #tpu.dot_dimension_numbers<[1], [0], [0], [1], [0, 0, 1, 1], [], []>} : vector<64x16xbf16>, vector<16x128xbf16>, vector<64x128xf32> -> vector<64x128xf32>
    %118 = vector.broadcast %114 : vector<1x128xf32> to vector<64x128xf32>
    %119 = arith.addf %117, %118 : vector<64x128xf32>
    %cst_49 = arith.constant 0.000000e+00 : f32
    %120 = vector.broadcast %cst_49 : f32 to vector<8x32xf32>
    %cst_50 = arith.constant 0.000000e+00 : f32
    %121 = vector.broadcast %cst_50 : f32 to vector<8x32xf32>
    %122 = vector.extract_strided_slice %119 {offsets = [0, 0], sizes = [8, 128], strides = [1, 1]} : vector<64x128xf32> to vector<8x128xf32>
    %123 = arith.truncf %120 : vector<8x32xf32> to vector<8x32xbf16>
    %cst_51 = arith.constant dense<0.000000e+00> : vector<8x128xf32>
    %124 = tpu.matmul %123, %111, %cst_51 {dimension_numbers = #tpu.dot_dimension_numbers<[1], [0], [0], [1], [0, 0, 1, 1], [], []>} : vector<8x32xbf16>, vector<32x128xbf16>, vector<8x128xf32> -> vector<8x128xf32>
    %125 = arith.addf %122, %124 : vector<8x128xf32>
    %126 = arith.negf %125 : vector<8x128xf32>
    %127 = math.exp %126 : vector<8x128xf32>
    %cst_52 = arith.constant 1.000000e+00 : f32
    %128 = vector.broadcast %cst_52 : f32 to vector<8x128xf32>
    %129 = arith.addf %128, %127 : vector<8x128xf32>
    %130 = arith.divf %128, %129 : vector<8x128xf32>
    %131 = math.tanh %125 : vector<8x128xf32>
    %132 = vector.extract_strided_slice %130 {offsets = [0, 0], sizes = [8, 32], strides = [1, 1]} : vector<8x128xf32> to vector<8x32xf32>
    %133 = vector.extract_strided_slice %130 {offsets = [0, 32], sizes = [8, 32], strides = [1, 1]} : vector<8x128xf32> to vector<8x32xf32>
    %134 = vector.extract_strided_slice %131 {offsets = [0, 64], sizes = [8, 32], strides = [1, 1]} : vector<8x128xf32> to vector<8x32xf32>
    %135 = vector.extract_strided_slice %130 {offsets = [0, 96], sizes = [8, 32], strides = [1, 1]} : vector<8x128xf32> to vector<8x32xf32>
    %136 = arith.mulf %133, %121 : vector<8x32xf32>
    %137 = arith.mulf %132, %134 : vector<8x32xf32>
    %138 = arith.addf %136, %137 : vector<8x32xf32>
    %139 = math.tanh %138 : vector<8x32xf32>
    %140 = arith.mulf %135, %139 : vector<8x32xf32>
    %c0_53 = arith.constant 0 : index
    %c0_54 = arith.constant 0 : index
    %141 = vector.load %arg9[%c0_53, %c0_54] : memref<64x32xf32, #tpu.memory_space<vmem>>, vector<8x32xf32>
    tpu.vector_store %arg9[%c0_53, %c0_54], %140 {strides = array<i32>} : memref<64x32xf32, #tpu.memory_space<vmem>>, vector<8x32xf32>,
    %142 = vector.extract_strided_slice %119 {offsets = [8, 0], sizes = [8, 128], strides = [1, 1]} : vector<64x128xf32> to vector<8x128xf32>
    %143 = arith.truncf %140 : vector<8x32xf32> to vector<8x32xbf16>
    %cst_55 = arith.constant dense<0.000000e+00> : vector<8x128xf32>
    %144 = tpu.matmul %143, %111, %cst_55 {dimension_numbers = #tpu.dot_dimension_numbers<[1], [0], [0], [1], [0, 0, 1, 1], [], []>} : vector<8x32xbf16>, vector<32x128xbf16>, vector<8x128xf32> -> vector<8x128xf32>
    %145 = arith.addf %142, %144 : vector<8x128xf32>
    %146 = arith.negf %145 : vector<8x128xf32>
    %147 = math.exp %146 : vector<8x128xf32>
    %cst_56 = arith.constant 1.000000e+00 : f32
    %148 = vector.broadcast %cst_56 : f32 to vector<8x128xf32>
    %149 = arith.addf %148, %147 : vector<8x128xf32>
    %150 = arith.divf %148, %149 : vector<8x128xf32>
    %151 = math.tanh %145 : vector<8x128xf32>
    %152 = vector.extract_strided_slice %150 {offsets = [0, 0], sizes = [8, 32], strides = [1, 1]} : vector<8x128xf32> to vector<8x32xf32>
    %153 = vector.extract_strided_slice %150 {offsets = [0, 32], sizes = [8, 32], strides = [1, 1]} : vector<8x128xf32> to vector<8x32xf32>
    %154 = vector.extract_strided_slice %151 {offsets = [0, 64], sizes = [8, 32], strides = [1, 1]} : vector<8x128xf32> to vector<8x32xf32>
    %155 = vector.extract_strided_slice %150 {offsets = [0, 96], sizes = [8, 32], strides = [1, 1]} : vector<8x128xf32> to vector<8x32xf32>
    %156 = arith.mulf %153, %138 : vector<8x32xf32>
    %157 = arith.mulf %152, %154 : vector<8x32xf32>
    %158 = arith.addf %156, %157 : vector<8x32xf32>
    %159 = math.tanh %158 : vector<8x32xf32>
    %160 = arith.mulf %155, %159 : vector<8x32xf32>
    %c8 = arith.constant 8 : index
    %c0_57 = arith.constant 0 : index
    %161 = vector.load %arg9[%c8, %c0_57] : memref<64x32xf32, #tpu.memory_space<vmem>>, vector<8x32xf32>
    tpu.vector_store %arg9[%c8, %c0_57], %160 {strides = array<i32>} : memref<64x32xf32, #tpu.memory_space<vmem>>, vector<8x32xf32>,
    %162 = vector.extract_strided_slice %119 {offsets = [16, 0], sizes = [8, 128], strides = [1, 1]} : vector<64x128xf32> to vector<8x128xf32>
    %163 = arith.truncf %160 : vector<8x32xf32> to vector<8x32xbf16>
    %cst_58 = arith.constant dense<0.000000e+00> : vector<8x128xf32>
    %164 = tpu.matmul %163, %111, %cst_58 {dimension_numbers = #tpu.dot_dimension_numbers<[1], [0], [0], [1], [0, 0, 1, 1], [], []>} : vector<8x32xbf16>, vector<32x128xbf16>, vector<8x128xf32> -> vector<8x128xf32>
    %165 = arith.addf %162, %164 : vector<8x128xf32>
    %166 = arith.negf %165 : vector<8x128xf32>
    %167 = math.exp %166 : vector<8x128xf32>
    %cst_59 = arith.constant 1.000000e+00 : f32
    %168 = vector.broadcast %cst_59 : f32 to vector<8x128xf32>
    %169 = arith.addf %168, %167 : vector<8x128xf32>
    %170 = arith.divf %168, %169 : vector<8x128xf32>
    %171 = math.tanh %165 : vector<8x128xf32>
    %172 = vector.extract_strided_slice %170 {offsets = [0, 0], sizes = [8, 32], strides = [1, 1]} : vector<8x128xf32> to vector<8x32xf32>
    %173 = vector.extract_strided_slice %170 {offsets = [0, 32], sizes = [8, 32], strides = [1, 1]} : vector<8x128xf32> to vector<8x32xf32>
    %174 = vector.extract_strided_slice %171 {offsets = [0, 64], sizes = [8, 32], strides = [1, 1]} : vector<8x128xf32> to vector<8x32xf32>
    %175 = vector.extract_strided_slice %170 {offsets = [0, 96], sizes = [8, 32], strides = [1, 1]} : vector<8x128xf32> to vector<8x32xf32>
    %176 = arith.mulf %173, %158 : vector<8x32xf32>
    %177 = arith.mulf %172, %174 : vector<8x32xf32>
    %178 = arith.addf %176, %177 : vector<8x32xf32>
    %179 = math.tanh %178 : vector<8x32xf32>
    %180 = arith.mulf %175, %179 : vector<8x32xf32>
    %c16 = arith.constant 16 : index
    %c0_60 = arith.constant 0 : index
    %181 = vector.load %arg9[%c16, %c0_60] : memref<64x32xf32, #tpu.memory_space<vmem>>, vector<8x32xf32>
    tpu.vector_store %arg9[%c16, %c0_60], %180 {strides = array<i32>} : memref<64x32xf32, #tpu.memory_space<vmem>>, vector<8x32xf32>,
    %182 = vector.extract_strided_slice %119 {offsets = [24, 0], sizes = [8, 128], strides = [1, 1]} : vector<64x128xf32> to vector<8x128xf32>
    %183 = arith.truncf %180 : vector<8x32xf32> to vector<8x32xbf16>
    %cst_61 = arith.constant dense<0.000000e+00> : vector<8x128xf32>
    %184 = tpu.matmul %183, %111, %cst_61 {dimension_numbers = #tpu.dot_dimension_numbers<[1], [0], [0], [1], [0, 0, 1, 1], [], []>} : vector<8x32xbf16>, vector<32x128xbf16>, vector<8x128xf32> -> vector<8x128xf32>
    %185 = arith.addf %182, %184 : vector<8x128xf32>
    %186 = arith.negf %185 : vector<8x128xf32>
    %187 = math.exp %186 : vector<8x128xf32>
    %cst_62 = arith.constant 1.000000e+00 : f32
    %188 = vector.broadcast %cst_62 : f32 to vector<8x128xf32>
    %189 = arith.addf %188, %187 : vector<8x128xf32>
    %190 = arith.divf %188, %189 : vector<8x128xf32>
    %191 = math.tanh %185 : vector<8x128xf32>
    %192 = vector.extract_strided_slice %190 {offsets = [0, 0], sizes = [8, 32], strides = [1, 1]} : vector<8x128xf32> to vector<8x32xf32>
    %193 = vector.extract_strided_slice %190 {offsets = [0, 32], sizes = [8, 32], strides = [1, 1]} : vector<8x128xf32> to vector<8x32xf32>
    %194 = vector.extract_strided_slice %191 {offsets = [0, 64], sizes = [8, 32], strides = [1, 1]} : vector<8x128xf32> to vector<8x32xf32>
    %195 = vector.extract_strided_slice %190 {offsets = [0, 96], sizes = [8, 32], strides = [1, 1]} : vector<8x128xf32> to vector<8x32xf32>
    %196 = arith.mulf %193, %178 : vector<8x32xf32>
    %197 = arith.mulf %192, %194 : vector<8x32xf32>
    %198 = arith.addf %196, %197 : vector<8x32xf32>
    %199 = math.tanh %198 : vector<8x32xf32>
    %200 = arith.mulf %195, %199 : vector<8x32xf32>
    %c24 = arith.constant 24 : index
    %c0_63 = arith.constant 0 : index
    %201 = vector.load %arg9[%c24, %c0_63] : memref<64x32xf32, #tpu.memory_space<vmem>>, vector<8x32xf32>
    tpu.vector_store %arg9[%c24, %c0_63], %200 {strides = array<i32>} : memref<64x32xf32, #tpu.memory_space<vmem>>, vector<8x32xf32>,
    %202 = vector.extract_strided_slice %119 {offsets = [32, 0], sizes = [8, 128], strides = [1, 1]} : vector<64x128xf32> to vector<8x128xf32>
    %203 = arith.truncf %200 : vector<8x32xf32> to vector<8x32xbf16>
    %cst_64 = arith.constant dense<0.000000e+00> : vector<8x128xf32>
    %204 = tpu.matmul %203, %111, %cst_64 {dimension_numbers = #tpu.dot_dimension_numbers<[1], [0], [0], [1], [0, 0, 1, 1], [], []>} : vector<8x32xbf16>, vector<32x128xbf16>, vector<8x128xf32> -> vector<8x128xf32>
    %205 = arith.addf %202, %204 : vector<8x128xf32>
    %206 = arith.negf %205 : vector<8x128xf32>
    %207 = math.exp %206 : vector<8x128xf32>
    %cst_65 = arith.constant 1.000000e+00 : f32
    %208 = vector.broadcast %cst_65 : f32 to vector<8x128xf32>
    %209 = arith.addf %208, %207 : vector<8x128xf32>
    %210 = arith.divf %208, %209 : vector<8x128xf32>
    %211 = math.tanh %205 : vector<8x128xf32>
    %212 = vector.extract_strided_slice %210 {offsets = [0, 0], sizes = [8, 32], strides = [1, 1]} : vector<8x128xf32> to vector<8x32xf32>
    %213 = vector.extract_strided_slice %210 {offsets = [0, 32], sizes = [8, 32], strides = [1, 1]} : vector<8x128xf32> to vector<8x32xf32>
    %214 = vector.extract_strided_slice %211 {offsets = [0, 64], sizes = [8, 32], strides = [1, 1]} : vector<8x128xf32> to vector<8x32xf32>
    %215 = vector.extract_strided_slice %210 {offsets = [0, 96], sizes = [8, 32], strides = [1, 1]} : vector<8x128xf32> to vector<8x32xf32>
    %216 = arith.mulf %213, %198 : vector<8x32xf32>
    %217 = arith.mulf %212, %214 : vector<8x32xf32>
    %218 = arith.addf %216, %217 : vector<8x32xf32>
    %219 = math.tanh %218 : vector<8x32xf32>
    %220 = arith.mulf %215, %219 : vector<8x32xf32>
    %c32 = arith.constant 32 : index
    %c0_66 = arith.constant 0 : index
    %221 = vector.load %arg9[%c32, %c0_66] : memref<64x32xf32, #tpu.memory_space<vmem>>, vector<8x32xf32>
    tpu.vector_store %arg9[%c32, %c0_66], %220 {strides = array<i32>} : memref<64x32xf32, #tpu.memory_space<vmem>>, vector<8x32xf32>,
    %222 = vector.extract_strided_slice %119 {offsets = [40, 0], sizes = [8, 128], strides = [1, 1]} : vector<64x128xf32> to vector<8x128xf32>
    %223 = arith.truncf %220 : vector<8x32xf32> to vector<8x32xbf16>
    %cst_67 = arith.constant dense<0.000000e+00> : vector<8x128xf32>
    %224 = tpu.matmul %223, %111, %cst_67 {dimension_numbers = #tpu.dot_dimension_numbers<[1], [0], [0], [1], [0, 0, 1, 1], [], []>} : vector<8x32xbf16>, vector<32x128xbf16>, vector<8x128xf32> -> vector<8x128xf32>
    %225 = arith.addf %222, %224 : vector<8x128xf32>
    %226 = arith.negf %225 : vector<8x128xf32>
    %227 = math.exp %226 : vector<8x128xf32>
    %cst_68 = arith.constant 1.000000e+00 : f32
    %228 = vector.broadcast %cst_68 : f32 to vector<8x128xf32>
    %229 = arith.addf %228, %227 : vector<8x128xf32>
    %230 = arith.divf %228, %229 : vector<8x128xf32>
    %231 = math.tanh %225 : vector<8x128xf32>
    %232 = vector.extract_strided_slice %230 {offsets = [0, 0], sizes = [8, 32], strides = [1, 1]} : vector<8x128xf32> to vector<8x32xf32>
    %233 = vector.extract_strided_slice %230 {offsets = [0, 32], sizes = [8, 32], strides = [1, 1]} : vector<8x128xf32> to vector<8x32xf32>
    %234 = vector.extract_strided_slice %231 {offsets = [0, 64], sizes = [8, 32], strides = [1, 1]} : vector<8x128xf32> to vector<8x32xf32>
    %235 = vector.extract_strided_slice %230 {offsets = [0, 96], sizes = [8, 32], strides = [1, 1]} : vector<8x128xf32> to vector<8x32xf32>
    %236 = arith.mulf %233, %218 : vector<8x32xf32>
    %237 = arith.mulf %232, %234 : vector<8x32xf32>
    %238 = arith.addf %236, %237 : vector<8x32xf32>
    %239 = math.tanh %238 : vector<8x32xf32>
    %240 = arith.mulf %235, %239 : vector<8x32xf32>
    %c40 = arith.constant 40 : index
    %c0_69 = arith.constant 0 : index
    %241 = vector.load %arg9[%c40, %c0_69] : memref<64x32xf32, #tpu.memory_space<vmem>>, vector<8x32xf32>
    tpu.vector_store %arg9[%c40, %c0_69], %240 {strides = array<i32>} : memref<64x32xf32, #tpu.memory_space<vmem>>, vector<8x32xf32>,
    %242 = vector.extract_strided_slice %119 {offsets = [48, 0], sizes = [8, 128], strides = [1, 1]} : vector<64x128xf32> to vector<8x128xf32>
    %243 = arith.truncf %240 : vector<8x32xf32> to vector<8x32xbf16>
    %cst_70 = arith.constant dense<0.000000e+00> : vector<8x128xf32>
    %244 = tpu.matmul %243, %111, %cst_70 {dimension_numbers = #tpu.dot_dimension_numbers<[1], [0], [0], [1], [0, 0, 1, 1], [], []>} : vector<8x32xbf16>, vector<32x128xbf16>, vector<8x128xf32> -> vector<8x128xf32>
    %245 = arith.addf %242, %244 : vector<8x128xf32>
    %246 = arith.negf %245 : vector<8x128xf32>
    %247 = math.exp %246 : vector<8x128xf32>
    %cst_71 = arith.constant 1.000000e+00 : f32
    %248 = vector.broadcast %cst_71 : f32 to vector<8x128xf32>
    %249 = arith.addf %248, %247 : vector<8x128xf32>
    %250 = arith.divf %248, %249 : vector<8x128xf32>
    %251 = math.tanh %245 : vector<8x128xf32>
    %252 = vector.extract_strided_slice %250 {offsets = [0, 0], sizes = [8, 32], strides = [1, 1]} : vector<8x128xf32> to vector<8x32xf32>
    %253 = vector.extract_strided_slice %250 {offsets = [0, 32], sizes = [8, 32], strides = [1, 1]} : vector<8x128xf32> to vector<8x32xf32>
    %254 = vector.extract_strided_slice %251 {offsets = [0, 64], sizes = [8, 32], strides = [1, 1]} : vector<8x128xf32> to vector<8x32xf32>
    %255 = vector.extract_strided_slice %250 {offsets = [0, 96], sizes = [8, 32], strides = [1, 1]} : vector<8x128xf32> to vector<8x32xf32>
    %256 = arith.mulf %253, %238 : vector<8x32xf32>
    %257 = arith.mulf %252, %254 : vector<8x32xf32>
    %258 = arith.addf %256, %257 : vector<8x32xf32>
    %259 = math.tanh %258 : vector<8x32xf32>
    %260 = arith.mulf %255, %259 : vector<8x32xf32>
    %c48 = arith.constant 48 : index
    %c0_72 = arith.constant 0 : index
    %261 = vector.load %arg9[%c48, %c0_72] : memref<64x32xf32, #tpu.memory_space<vmem>>, vector<8x32xf32>
    tpu.vector_store %arg9[%c48, %c0_72], %260 {strides = array<i32>} : memref<64x32xf32, #tpu.memory_space<vmem>>, vector<8x32xf32>,
    %262 = vector.extract_strided_slice %119 {offsets = [56, 0], sizes = [8, 128], strides = [1, 1]} : vector<64x128xf32> to vector<8x128xf32>
    %263 = arith.truncf %260 : vector<8x32xf32> to vector<8x32xbf16>
    %cst_73 = arith.constant dense<0.000000e+00> : vector<8x128xf32>
    %264 = tpu.matmul %263, %111, %cst_73 {dimension_numbers = #tpu.dot_dimension_numbers<[1], [0], [0], [1], [0, 0, 1, 1], [], []>} : vector<8x32xbf16>, vector<32x128xbf16>, vector<8x128xf32> -> vector<8x128xf32>
    %265 = arith.addf %262, %264 : vector<8x128xf32>
    %266 = arith.negf %265 : vector<8x128xf32>
    %267 = math.exp %266 : vector<8x128xf32>
    %cst_74 = arith.constant 1.000000e+00 : f32
    %268 = vector.broadcast %cst_74 : f32 to vector<8x128xf32>
    %269 = arith.addf %268, %267 : vector<8x128xf32>
    %270 = arith.divf %268, %269 : vector<8x128xf32>
    %271 = math.tanh %265 : vector<8x128xf32>
    %272 = vector.extract_strided_slice %270 {offsets = [0, 0], sizes = [8, 32], strides = [1, 1]} : vector<8x128xf32> to vector<8x32xf32>
    %273 = vector.extract_strided_slice %270 {offsets = [0, 32], sizes = [8, 32], strides = [1, 1]} : vector<8x128xf32> to vector<8x32xf32>
    %274 = vector.extract_strided_slice %271 {offsets = [0, 64], sizes = [8, 32], strides = [1, 1]} : vector<8x128xf32> to vector<8x32xf32>
    %275 = vector.extract_strided_slice %270 {offsets = [0, 96], sizes = [8, 32], strides = [1, 1]} : vector<8x128xf32> to vector<8x32xf32>
    %276 = arith.mulf %273, %258 : vector<8x32xf32>
    %277 = arith.mulf %272, %274 : vector<8x32xf32>
    %278 = arith.addf %276, %277 : vector<8x32xf32>
    %279 = math.tanh %278 : vector<8x32xf32>
    %280 = arith.mulf %275, %279 : vector<8x32xf32>
    %c56 = arith.constant 56 : index
    %c0_75 = arith.constant 0 : index
    %281 = vector.load %arg9[%c56, %c0_75] : memref<64x32xf32, #tpu.memory_space<vmem>>, vector<8x32xf32>
    tpu.vector_store %arg9[%c56, %c0_75], %280 {strides = array<i32>} : memref<64x32xf32, #tpu.memory_space<vmem>>, vector<8x32xf32>,
    %c0_76 = arith.constant 0 : index
    %c0_77 = arith.constant 0 : index
    %282 = vector.load %arg10[%c0_76, %c0_77] : memref<8x32xf32, #tpu.memory_space<vmem>>, vector<8x32xf32>
    tpu.vector_store %arg10[%c0_76, %c0_77], %280 {strides = array<i32>} : memref<8x32xf32, #tpu.memory_space<vmem>>, vector<8x32xf32>,
    %c0_78 = arith.constant 0 : index
    %c0_79 = arith.constant 0 : index
    %283 = vector.load %arg11[%c0_78, %c0_79] : memref<8x32xf32, #tpu.memory_space<vmem>>, vector<8x32xf32>
    tpu.vector_store %arg11[%c0_78, %c0_79], %278 {strides = array<i32>} : memref<8x32xf32, #tpu.memory_space<vmem>>, vector<8x32xf32>,
    return
  }
}

</mosaic_0001>

<llo_original>
// kernel: bayes_rnn_forward.1
$region0: #{bayes_rnn_forward.1}
  #allocation0 [shape = 'u32[]', space=smem, size = 0x4, offset = 0x4, fixed_abs, tag = 'smem constant byte address 0x4 - core index']
  #allocation1 [shape = 'u32[144,128]{1,0:T(1,128)}', space=vmem, size = 0x12000, scoped, tag = 'internal scratch']
  %s0 = inlined_call_operand.hbm [shape: f32[64,16], index: 0, kind: input, shape index: {}]
  %s1 = inlined_call_operand.hbm [shape: f32[16,128], index: 1, kind: input, shape index: {}]
  %s2 = inlined_call_operand.hbm [shape: f32[16,128], index: 2, kind: input, shape index: {}]
  %s3 = inlined_call_operand.hbm [shape: f32[16,128], index: 3, kind: input, shape index: {}]
  %s4 = inlined_call_operand.hbm [shape: f32[32,128], index: 4, kind: input, shape index: {}]
  %s5 = inlined_call_operand.hbm [shape: f32[32,128], index: 5, kind: input, shape index: {}]
  %s6 = inlined_call_operand.vmem [shape: f32[32,128], index: 6, kind: input, shape index: {}]
  %s7 = inlined_call_operand.vmem [shape: f32[1,128], index: 7, kind: input, shape index: {}]
  %s8 = inlined_call_operand.vmem [shape: f32[1,128], index: 8, kind: input, shape index: {}]
  %s9 = inlined_call_operand.hbm [shape: f32[64,32], index: 9, kind: output, shape index: {0}]
  %s10 = inlined_call_operand.hbm [shape: f32[8,32], index: 10, kind: output, shape index: {1}]
  %s11 = inlined_call_operand.hbm [shape: f32[8,32], index: 11, kind: output, shape index: {2}]
  %s12 = inlined_call_operand.hbm [shape: f32[1,1], index: 12, kind: output, shape index: {3}]
  %13 = xla_tuple %s9, %s10, %s11, %s12
  %s14 = sld [smem:[#allocation0]]
  $region94: #{bayes_rnn_forward.1} parent=0
    _
  %s16 = ssub.s32 1, %s14
  %s17 = scalar_select 0, %s16, %s14
  $region1: #{bayes_rnn_forward.1} parent=0
    #allocation2 [shape = 'u8[32768]{0}', space=vmem, size = 0x8000, scoped, tag = 'input window, operand 0, single buffered']
    #allocation3 [shape = 's32[1]{0}', space=sflag, size = 0x4, scoped, tag = 'scoped memory for bayes_rnn_forward.1']
    #allocation4 [shape = 's32[1]{0}', space=sflag, size = 0x4, scoped, tag = 'scoped memory for bayes_rnn_forward.1']
    #allocation5 [shape = 'u8[8192]{0}', space=vmem, size = 0x2000, scoped, tag = 'input window, operand 1, single buffered']
    #allocation6 [shape = 's32[1]{0}', space=sflag, size = 0x4, scoped, tag = 'scoped memory for bayes_rnn_forward.1']
    #allocation7 [shape = 'u8[8192]{0}', space=vmem, size = 0x2000, scoped, tag = 'input window, operand 2, single buffered']
    #allocation8 [shape = 'u8[8192]{0}', space=vmem, size = 0x2000, scoped, tag = 'input window, operand 3, single buffered']
    #allocation9 [shape = 's32[1]{0}', space=sflag, size = 0x4, scoped, tag = 'scoped memory for bayes_rnn_forward.1']
    #allocation10 [shape = 'u8[16384]{0}', space=vmem, size = 0x4000, scoped, tag = 'input window, operand 4, single buffered']
    #allocation11 [shape = 'u8[16384]{0}', space=vmem, size = 0x4000, scoped, tag = 'input window, operand 5, single buffered']
    #allocation12 [shape = 's32[1]{0}', space=sflag, size = 0x4, scoped, tag = 'scoped memory for bayes_rnn_forward.1']
    #allocation13 [shape = 'u8[32768]{0}', space=vmem, size = 0x8000, scoped, tag = 'output window, operand 0, single buffered']
    #allocation14 [shape = 'u8[4096]{0}', space=vmem, size = 0x1000, scoped, tag = 'output window, operand 1, single buffered']
    #allocation15 [shape = 's32[1]{0}', space=sflag, size = 0x4, scoped, tag = 'scoped memory for bayes_rnn_forward.1']
    #allocation16 [shape = 'u8[4096]{0}', space=vmem, size = 0x1000, scoped, tag = 'output window, operand 2, single buffered']
    #allocation17 [shape = 'u8[512]{0}', space=vmem, size = 0x400, scoped, tag = 'output window, operand 3, single buffered']
    #allocation18 [shape = 's32[1]{0}', space=sflag, size = 0x4, scoped, tag = 'scoped memory for bayes_rnn_forward.1']
    %18 = vsyncpa [#allocation3], 0
    %19 = vsyncpa [#allocation6], 0
    %20 = vsyncpa [#allocation9], 0
    %21 = vsyncpa [#allocation12], 0
    %22 = vsyncpa [#allocation4], 0
    %23 = vsyncpa [#allocation15], 0
    %24 = vsyncpa [#allocation18], 0
    // Predicated region
    $region2: #{bayes_rnn_forward.1} parent=1 // pred_check
      _
    $region3: #{bayes_rnn_forward.1} parent=1 // pred_check_branch
      %26 = sbr.rel (0) target = $region5
    $region4: #{bayes_rnn_forward.1} parent=1 // pred_region
      %s28 = ssub.s32 1024, 1024
      %29 = vsyncadd [#allocation3], %s28
      %s30 = sshll.u32 [#allocation2], 4
      %s31 = int_to_ptr.vmem [resolvable:$true] %s30
      %36 = dma.hbm_to_vmem [thread:$0]  %s0, 1024, %s31, [#allocation3], 128, 128, 8
    $region5: #{bayes_rnn_forward.1} parent=1 // pred_fallthru
      _
    // Predicated region
    $region6: #{bayes_rnn_forward.1} parent=1 // pred_check
      _
    $region7: #{bayes_rnn_forward.1} parent=1 // pred_check_branch
      %38 = sbr.rel (0) target = $region9
    $region8: #{bayes_rnn_forward.1} parent=1 // pred_region
      %s40 = ssub.s32 256, 256
      %41 = vsyncadd [#allocation6], %s40
      %s42 = sshll.u32 [#allocation5], 4
      %s43 = int_to_ptr.vmem [resolvable:$true] %s42
      %48 = dma.hbm_to_vmem [thread:$0]  %s1, 256, %s43, [#allocation6], 128, 128, 8
    $region9: #{bayes_rnn_forward.1} parent=1 // pred_fallthru
      _
    // Predicated region
    $region10: #{bayes_rnn_forward.1} parent=1 // pred_check
      _
    $region11: #{bayes_rnn_forward.1} parent=1 // pred_check_branch
      %50 = sbr.rel (0) target = $region13
    $region12: #{bayes_rnn_forward.1} parent=1 // pred_region
      %s52 = ssub.s32 256, 256
      %53 = vsyncadd [#allocation6], %s52
      %s54 = sshll.u32 [#allocation7], 4
      %s55 = int_to_ptr.vmem [resolvable:$true] %s54
      %60 = dma.hbm_to_vmem [thread:$0]  %s2, 256, %s55, [#allocation6], 128, 128, 8
    $region13: #{bayes_rnn_forward.1} parent=1 // pred_fallthru
      _
    // Predicated region
    $region14: #{bayes_rnn_forward.1} parent=1 // pred_check
      _
    $region15: #{bayes_rnn_forward.1} parent=1 // pred_check_branch
      %62 = sbr.rel (0) target = $region17
    $region16: #{bayes_rnn_forward.1} parent=1 // pred_region
      %s64 = ssub.s32 256, 256
      %65 = vsyncadd [#allocation9], %s64
      %s66 = sshll.u32 [#allocation8], 4
      %s67 = int_to_ptr.vmem [resolvable:$true] %s66
      %72 = dma.hbm_to_vmem [thread:$0]  %s3, 256, %s67, [#allocation9], 128, 128, 8
    $region17: #{bayes_rnn_forward.1} parent=1 // pred_fallthru
      _
    // Predicated region
    $region18: #{bayes_rnn_forward.1} parent=1 // pred_check
      _
    $region19: #{bayes_rnn_forward.1} parent=1 // pred_check_branch
      %74 = sbr.rel (0) target = $region21
    $region20: #{bayes_rnn_forward.1} parent=1 // pred_region
      %s76 = ssub.s32 512, 512
      %77 = vsyncadd [#allocation9], %s76
      %s78 = sshll.u32 [#allocation10], 4
      %s79 = int_to_ptr.vmem [resolvable:$true] %s78
      %84 = dma.hbm_to_vmem [thread:$0]  %s4, 512, %s79, [#allocation9], 128, 128, 8
    $region21: #{bayes_rnn_forward.1} parent=1 // pred_fallthru
      _
    // Predicated region
    $region22: #{bayes_rnn_forward.1} parent=1 // pred_check
      _
    $region23: #{bayes_rnn_forward.1} parent=1 // pred_check_branch
      %86 = sbr.rel (0) target = $region25
    $region24: #{bayes_rnn_forward.1} parent=1 // pred_region
      %s88 = ssub.s32 512, 512
      %89 = vsyncadd [#allocation12], %s88
      %s90 = sshll.u32 [#allocation11], 4
      %s91 = int_to_ptr.vmem [resolvable:$true] %s90
      %96 = dma.hbm_to_vmem [thread:$0]  %s5, 512, %s91, [#allocation12], 128, 128, 8
    $region25: #{bayes_rnn_forward.1} parent=1 // pred_fallthru
      _
    // Predicated region
    $region26: #{bayes_rnn_forward.1} parent=1 // pred_check
      _
    $region27: #{bayes_rnn_forward.1} parent=1 // pred_check_branch
      %98 = sbr.rel (0) target = $region29
    $region28: #{bayes_rnn_forward.1} parent=1 // pred_region
      _
    $region29: #{bayes_rnn_forward.1} parent=1 // pred_fallthru
      _
    // Predicated region
    $region30: #{bayes_rnn_forward.1} parent=1 // pred_check
      _
    $region31: #{bayes_rnn_forward.1} parent=1 // pred_check_branch
      %100 = sbr.rel (0) target = $region33
    $region32: #{bayes_rnn_forward.1} parent=1 // pred_region
      _
    $region33: #{bayes_rnn_forward.1} parent=1 // pred_fallthru
      _
    // Predicated region
    $region34: #{bayes_rnn_forward.1} parent=1 // pred_check
      _
    $region35: #{bayes_rnn_forward.1} parent=1 // pred_check_branch
      %102 = sbr.rel (0) target = $region37
    $region36: #{bayes_rnn_forward.1} parent=1 // pred_region
      _
    $region37: #{bayes_rnn_forward.1} parent=1 // pred_fallthru
      _
    // Predicated region
    $region38: #{bayes_rnn_forward.1} parent=1 // pred_check
      _
    $region39: #{bayes_rnn_forward.1} parent=1 // pred_check_branch
      %104 = sbr.rel (0) target = $region41
    $region40: #{bayes_rnn_forward.1} parent=1 // pred_region
      %105 = dma.done [#allocation3], 1024
    $region41: #{bayes_rnn_forward.1} parent=1 // pred_fallthru
      _
    // Predicated region
    $region42: #{bayes_rnn_forward.1} parent=1 // pred_check
      _
    $region43: #{bayes_rnn_forward.1} parent=1 // pred_check_branch
      %107 = sbr.rel (0) target = $region45
    $region44: #{bayes_rnn_forward.1} parent=1 // pred_region
      %108 = dma.done [#allocation6], 256
    $region45: #{bayes_rnn_forward.1} parent=1 // pred_fallthru
      _
    // Predicated region
    $region46: #{bayes_rnn_forward.1} parent=1 // pred_check
      _
    $region47: #{bayes_rnn_forward.1} parent=1 // pred_check_branch
      %110 = sbr.rel (0) target = $region49
    $region48: #{bayes_rnn_forward.1} parent=1 // pred_region
      %111 = dma.done [#allocation6], 256
    $region49: #{bayes_rnn_forward.1} parent=1 // pred_fallthru
      _
    // Predicated region
    $region50: #{bayes_rnn_forward.1} parent=1 // pred_check
      _
    $region51: #{bayes_rnn_forward.1} parent=1 // pred_check_branch
      %113 = sbr.rel (0) target = $region53
    $region52: #{bayes_rnn_forward.1} parent=1 // pred_region
      %114 = dma.done [#allocation9], 256
    $region53: #{bayes_rnn_forward.1} parent=1 // pred_fallthru
      _
    // Predicated region
    $region54: #{bayes_rnn_forward.1} parent=1 // pred_check
      _
    $region55: #{bayes_rnn_forward.1} parent=1 // pred_check_branch
      %116 = sbr.rel (0) target = $region57
    $region56: #{bayes_rnn_forward.1} parent=1 // pred_region
      %117 = dma.done [#allocation9], 512
    $region57: #{bayes_rnn_forward.1} parent=1 // pred_fallthru
      _
    // Predicated region
    $region58: #{bayes_rnn_forward.1} parent=1 // pred_check
      _
    $region59: #{bayes_rnn_forward.1} parent=1 // pred_check_branch
      %119 = sbr.rel (0) target = $region61
    $region60: #{bayes_rnn_forward.1} parent=1 // pred_region
      %120 = dma.done [#allocation12], 512
    $region61: #{bayes_rnn_forward.1} parent=1 // pred_fallthru
      _
    %v122 = vld [vmem:[#allocation5] sm:$0xff]
    %v123 = vld [vmem:[#allocation5 + $0x8] sm:$0xff]
    %v124 = vld [vmem:[#allocation7] sm:$0xff]
    %v125 = vld [vmem:[#allocation7 + $0x8] sm:$0xff]
    %v126 = vld [vmem:[#allocation8] sm:$0xff]
    %v127 = vld [vmem:[#allocation8 + $0x8] sm:$0xff]
    %v128 = vmax.f32 %v124, 0.0
    %v129 = vmax.f32 %v125, 0.0
    %v130 = vand.u32 2147483647, %v124
    %v131 = vand.u32 2147483647, %v125
    %v132 = vsub.f32 0.0, %v130
    %v133 = vsub.f32 0.0, %v131
    %v134 = vmul.f32 %v132, 1.442695
    %v135 = vpow.pop %v134
    %v136 = vmul.f32 %v133, 1.442695
    %v137 = vpow.pop %v136
    %v138 = vadd.f32 %v135, 1.0
    %v139 = vadd.f32 %v137, 1.0
    %v140 = vlog2.pop %v138
    %v141 = vmul.f32 %v140, 0.6931472
    %v142 = vlog2.pop %v139
    %v143 = vmul.f32 %v142, 0.6931472
    %v144 = vadd.f32 %v128, %v141
    %v145 = vadd.f32 %v129, %v143
    %v146 = vadd.f32 %v144, 1e-05
    %v147 = vadd.f32 %v145, 1e-05
    %v148 = vmul.f32 %v126, %v146
    %v149 = vmul.f32 %v127, %v147
    %v150 = vadd.f32 %v122, %v148
    %v151 = vadd.f32 %v123, %v149
    %v152 = vlog2.pop %v146
    %v153 = vmul.f32 %v152, 0.6931472
    %v154 = vlog2.pop %v147
    %v155 = vmul.f32 %v154, 0.6931472
    %v156 = vsub.f32 0.0, %v153
    %v157 = vsub.f32 0.0, %v155
    %v158 = vmul.f32 %v126, 0.5
    %v159 = vmul.f32 %v127, 0.5
    %v160 = vmul.f32 %v158, %v126
    %v161 = vmul.f32 %v159, %v127
    %v162 = vsub.f32 %v156, %v160
    %v163 = vsub.f32 %v157, %v161
    %v164 = vmul.f32 %v150, 2.7182817
    %v165 = vmul.f32 %v151, 2.7182817
    %v166 = vmul.f32 %v164, %v164
    %v167 = vmul.f32 %v165, %v165
    %v168 = vmul.f32 %v166, 0.5
    %v169 = vmul.f32 %v167, 0.5
    %v170 = vsub.f32 -0.38629436, %v168
    %v171 = vsub.f32 -0.38629436, %v169
    %v172 = vmul.f32 %v150, 1096.6332
    %v173 = vmul.f32 %v151, 1096.6332
    %v174 = vmul.f32 %v172, %v172
    %v175 = vmul.f32 %v173, %v173
    %v176 = vmul.f32 %v174, 0.5
    %v177 = vmul.f32 %v175, 0.5
    %v178 = vsub.f32 6.712318, %v176
    %v179 = vsub.f32 6.712318, %v177
    %v180 = vmax.f32 %v170, %v178
    %v181 = vmax.f32 %v171, %v179
    %v182 = vsub.f32 %v170, %v178
    %v183 = vsub.f32 %v171, %v179
    %v184 = vand.u32 2147483647, %v182
    %v185 = vand.u32 2147483647, %v183
    %v186 = vsub.f32 0.0, %v184
    %v187 = vsub.f32 0.0, %v185
    %v188 = vmul.f32 %v186, 1.442695
    %v189 = vpow.pop %v188
    %v190 = vmul.f32 %v187, 1.442695
    %v191 = vpow.pop %v190
    %v192 = vadd.f32 %v189, 1.0
    %v193 = vadd.f32 %v191, 1.0
    %v194 = vlog2.pop %v192
    %v195 = vmul.f32 %v194, 0.6931472
    %v196 = vlog2.pop %v193
    %v197 = vmul.f32 %v196, 0.6931472
    %v198 = vadd.f32 %v180, %v195
    %v199 = vadd.f32 %v181, %v197
    %v200 = vsub.f32 %v162, %v198
    %v201 = vsub.f32 %v163, %v199
    %v202 = vadd.f32 %v200, %v201
    %203 = vadd.xlane.f32.xlu0 %v202
    %v204 = vpop.xlane.xlu0 %203
    %v205 = vrot.slane %v204, 4
    %v206 = vadd.f32 %v204, %v205
    %v207 = vrot.slane %v206, 2
    %v208 = vadd.f32 %v206, %v207
    %v209 = vrot.slane %v208, 1
    %v210 = vadd.f32 %v208, %v209
    %s211 = vtos %v210
    %v212 = vstv %s211
    %v213 = vld [vmem:[#allocation10] sm:$0xff]
    %v214 = vld [vmem:[#allocation10 + $0x8] sm:$0xff]
    %v215 = vld [vmem:[#allocation10 + $0x10] sm:$0xff]
    %v216 = vld [vmem:[#allocation10 + $0x18] sm:$0xff]
    %v217 = vld [vmem:[#allocation11] sm:$0xff]
    %v218 = vld [vmem:[#allocation11 + $0x8] sm:$0xff]
    %v219 = vld [vmem:[#allocation11 + $0x10] sm:$0xff]
    %v220 = vld [vmem:[#allocation11 + $0x18] sm:$0xff]
    %v221 = vld [vmem:[%s6] sm:$0xff]
    %v222 = vld [vmem:[%s6 + $0x8] sm:$0xff]
    %v223 = vld [vmem:[%s6 + $0x10] sm:$0xff]
    %v224 = vld [vmem:[%s6 + $0x18] sm:$0xff]
    %v225 = vmax.f32 %v217, 0.0
    %v226 = vmax.f32 %v218, 0.0
    %v227 = vmax.f32 %v219, 0.0
    %v228 = vmax.f32 %v220, 0.0
    %v229 = vand.u32 2147483647, %v217
    %v230 = vand.u32 2147483647, %v218
    %v231 = vand.u32 2147483647, %v219
    %v232 = vand.u32 2147483647, %v220
    %v233 = vsub.f32 0.0, %v229
    %v234 = vsub.f32 0.0, %v230
    %v235 = vsub.f32 0.0, %v231
    %v236 = vsub.f32 0.0, %v232
    %v237 = vmul.f32 %v233, 1.442695
    %v238 = vpow.pop %v237
    %v239 = vmul.f32 %v234, 1.442695
    %v240 = vpow.pop %v239
    %v241 = vmul.f32 %v235, 1.442695
    %v242 = vpow.pop %v241
    %v243 = vmul.f32 %v236, 1.442695
    %v244 = vpow.pop %v243
    %v245 = vadd.f32 %v238, 1.0
    %v246 = vadd.f32 %v240, 1.0
    %v247 = vadd.f32 %v242, 1.0
    %v248 = vadd.f32 %v244, 1.0
    %v249 = vlog2.pop %v245
    %v250 = vmul.f32 %v249, 0.6931472
    %v251 = vlog2.pop %v246
    %v252 = vmul.f32 %v251, 0.6931472
    %v253 = vlog2.pop %v247
    %v254 = vmul.f32 %v253, 0.6931472
    %v255 = vlog2.pop %v248
    %v256 = vmul.f32 %v255, 0.6931472
    %v257 = vadd.f32 %v225, %v250
    %v258 = vadd.f32 %v226, %v252
    %v259 = vadd.f32 %v227, %v254
    %v260 = vadd.f32 %v228, %v256
    %v261 = vadd.f32 %v257, 1e-05
    %v262 = vadd.f32 %v258, 1e-05
    %v263 = vadd.f32 %v259, 1e-05
    %v264 = vadd.f32 %v260, 1e-05
    %v265 = vmul.f32 %v221, %v261
    %v266 = vmul.f32 %v222, %v262
    %v267 = vmul.f32 %v223, %v263
    %v268 = vmul.f32 %v224, %v264
    %v269 = vadd.f32 %v213, %v265
    %v270 = vadd.f32 %v214, %v266
    %v271 = vadd.f32 %v215, %v267
    %v272 = vadd.f32 %v216, %v268
    %v273 = vlog2.pop %v261
    %v274 = vmul.f32 %v273, 0.6931472
    %v275 = vlog2.pop %v262
    %v276 = vmul.f32 %v275, 0.6931472
    %v277 = vlog2.pop %v263
    %v278 = vmul.f32 %v277, 0.6931472
    %v279 = vlog2.pop %v264
    %v280 = vmul.f32 %v279, 0.6931472
    %v281 = vsub.f32 0.0, %v274
    %v282 = vsub.f32 0.0, %v276
    %v283 = vsub.f32 0.0, %v278
    %v284 = vsub.f32 0.0, %v280
    %v285 = vmul.f32 %v221, 0.5
    %v286 = vmul.f32 %v222, 0.5
    %v287 = vmul.f32 %v223, 0.5
    %v288 = vmul.f32 %v224, 0.5
    %v289 = vmul.f32 %v285, %v221
    %v290 = vmul.f32 %v286, %v222
    %v291 = vmul.f32 %v287, %v223
    %v292 = vmul.f32 %v288, %v224
    %v293 = vsub.f32 %v281, %v289
    %v294 = vsub.f32 %v282, %v290
    %v295 = vsub.f32 %v283, %v291
    %v296 = vsub.f32 %v284, %v292
    %v297 = vmul.f32 %v269, 2.7182817
    %v298 = vmul.f32 %v270, 2.7182817
    %v299 = vmul.f32 %v271, 2.7182817
    %v300 = vmul.f32 %v272, 2.7182817
    %v301 = vmul.f32 %v297, %v297
    %v302 = vmul.f32 %v298, %v298
    %v303 = vmul.f32 %v299, %v299
    %v304 = vmul.f32 %v300, %v300
    %v305 = vmul.f32 %v301, 0.5
    %v306 = vmul.f32 %v302, 0.5
    %v307 = vmul.f32 %v303, 0.5
    %v308 = vmul.f32 %v304, 0.5
    %v309 = vsub.f32 -0.38629436, %v305
    %v310 = vsub.f32 -0.38629436, %v306
    %v311 = vsub.f32 -0.38629436, %v307
    %v312 = vsub.f32 -0.38629436, %v308
    %v313 = vmul.f32 %v269, 1096.6332
    %v314 = vmul.f32 %v270, 1096.6332
    %v315 = vmul.f32 %v271, 1096.6332
    %v316 = vmul.f32 %v272, 1096.6332
    %v317 = vmul.f32 %v313, %v313
    %v318 = vmul.f32 %v314, %v314
    %v319 = vmul.f32 %v315, %v315
    %v320 = vmul.f32 %v316, %v316
    %v321 = vmul.f32 %v317, 0.5
    %v322 = vmul.f32 %v318, 0.5
    %v323 = vmul.f32 %v319, 0.5
    %v324 = vmul.f32 %v320, 0.5
    %v325 = vsub.f32 6.712318, %v321
    %v326 = vsub.f32 6.712318, %v322
    %v327 = vsub.f32 6.712318, %v323
    %v328 = vsub.f32 6.712318, %v324
    %v329 = vmax.f32 %v309, %v325
    %v330 = vmax.f32 %v310, %v326
    %v331 = vmax.f32 %v311, %v327
    %v332 = vmax.f32 %v312, %v328
    %v333 = vsub.f32 %v309, %v325
    %v334 = vsub.f32 %v310, %v326
    %v335 = vsub.f32 %v311, %v327
    %v336 = vsub.f32 %v312, %v328
    %v337 = vand.u32 2147483647, %v333
    %v338 = vand.u32 2147483647, %v334
    %v339 = vand.u32 2147483647, %v335
    %v340 = vand.u32 2147483647, %v336
    %v341 = vsub.f32 0.0, %v337
    %v342 = vsub.f32 0.0, %v338
    %v343 = vsub.f32 0.0, %v339
    %v344 = vsub.f32 0.0, %v340
    %v345 = vmul.f32 %v341, 1.442695
    %v346 = vpow.pop %v345
    %v347 = vmul.f32 %v342, 1.442695
    %v348 = vpow.pop %v347
    %v349 = vmul.f32 %v343, 1.442695
    %v350 = vpow.pop %v349
    %v351 = vmul.f32 %v344, 1.442695
    %v352 = vpow.pop %v351
    %v353 = vadd.f32 %v346, 1.0
    %v354 = vadd.f32 %v348, 1.0
    %v355 = vadd.f32 %v350, 1.0
    %v356 = vadd.f32 %v352, 1.0
    %v357 = vlog2.pop %v353
    %v358 = vmul.f32 %v357, 0.6931472
    %v359 = vlog2.pop %v354
    %v360 = vmul.f32 %v359, 0.6931472
    %v361 = vlog2.pop %v355
    %v362 = vmul.f32 %v361, 0.6931472
    %v363 = vlog2.pop %v356
    %v364 = vmul.f32 %v363, 0.6931472
    %v365 = vadd.f32 %v329, %v358
    %v366 = vadd.f32 %v330, %v360
    %v367 = vadd.f32 %v331, %v362
    %v368 = vadd.f32 %v332, %v364
    %v369 = vsub.f32 %v293, %v365
    %v370 = vsub.f32 %v294, %v366
    %v371 = vsub.f32 %v295, %v367
    %v372 = vsub.f32 %v296, %v368
    %v373 = vadd.f32 %v369, %v370
    %v374 = vadd.f32 %v373, %v371
    %v375 = vadd.f32 %v374, %v372
    %376 = vadd.xlane.f32.xlu0 %v375
    %v377 = vpop.xlane.xlu0 %376
    %v378 = vrot.slane %v377, 4
    %v379 = vadd.f32 %v377, %v378
    %v380 = vrot.slane %v379, 2
    %v381 = vadd.f32 %v379, %v380
    %v382 = vrot.slane %v381, 1
    %v383 = vadd.f32 %v381, %v382
    %s384 = vtos %v383
    %v385 = vstv %s384
    %v386 = vadd.f32 %v212, %v385
    %vm387 = vcmask 0
    %388 = vst.msk [vmem:[#allocation17] sm:$0x1] %vm387, %v386
    %v389 = vpack.c.bf16 %v151, %v150
    %v390 = vpack.c.bf16 %v270, %v269
    %v391 = vpack.c.bf16 %v272, %v271
    %v392 = vld [vmem:[%s7] sm:$0x1]
    %v393 = vld [vmem:[%s8] sm:$0x1]
    %v394 = vadd.f32 %v392, %v393
    %v395 = vld [vmem:[#allocation2] sm:$0xff]
    %v396 = vld [vmem:[#allocation2 + $0x8] sm:$0xff]
    %v397 = vld [vmem:[#allocation2 + $0x10] sm:$0xff]
    %v398 = vld [vmem:[#allocation2 + $0x18] sm:$0xff]
    %v399 = vld [vmem:[#allocation2 + $0x20] sm:$0xff]
    %v400 = vld [vmem:[#allocation2 + $0x28] sm:$0xff]
    %v401 = vld [vmem:[#allocation2 + $0x30] sm:$0xff]
    %v402 = vld [vmem:[#allocation2 + $0x38] sm:$0xff]
    %v403 = vpack.c.bf16 %v396, %v395
    %v404 = vpack.c.bf16 %v398, %v397
    %v405 = vpack.c.bf16 %v400, %v399
    %v406 = vpack.c.bf16 %v402, %v401
    %v408 = vlaneseq
    %v409 = vshrl.u32 %v408, 7
    %v410 = vsub.s32 0, %v409
    %v411 = vrot.slane %v394, %v410
    %vm413 = vcmask 130048
    %v415 = vsel %vm413, %v403, 0
    %v418 = vsel %vm413, %v404, 0
    %v421 = vsel %vm413, %v405, 0
    %v424 = vsel %vm413, %v406, 0
    %426 = vmatprep.subr.bf16.mxu0 0
    %427 = vmatpush1.bf16.msra.mxu0 %v389
    %428 = vmatprep.subr.bf16.mxu0 0
    %429 = vmatpush1.bf16.msra.mxu0 0
    %430 = vmatprep.subr.bf16.mxu0 0
    %431 = vmatpush1.bf16.msra.mxu0 0
    %432 = vmatprep.subr.bf16.mxu0 0
    %433 = vmatpush1.bf16.msra.mxu0 0
    %434 = vmatprep.subr.bf16.mxu0 0
    %435 = vmatpush1.bf16.msra.mxu0 0
    %436 = vmatprep.subr.bf16.mxu0 0
    %437 = vmatpush1.bf16.msra.mxu0 0
    %438 = vmatprep.subr.bf16.mxu0 0
    %439 = vmatpush1.bf16.msra.mxu0 0
    %440 = vmatprep.subr.bf16.mxu0 0
    %441 = vmatpush1.bf16.msra.mxu0 0
    %442 = vmatprep.subr.bf16.mxu0 0
    %443 = vmatpush1.bf16.msra.mxu0 0
    %444 = vmatprep.subr.bf16.mxu0 0
    %445 = vmatpush1.bf16.msra.mxu0 0
    %446 = vmatprep.subr.bf16.mxu0 0
    %447 = vmatpush1.bf16.msra.mxu0 0
    %448 = vmatprep.subr.bf16.mxu0 0
    %449 = vmatpush1.bf16.msra.mxu0 0
    %450 = vmatprep.subr.bf16.mxu0 0
    %451 = vmatpush1.bf16.msra.mxu0 0
    %452 = vmatprep.subr.bf16.mxu0 0
    %453 = vmatpush1.bf16.msra.mxu0 0
    %454 = vmatprep.subr.bf16.mxu0 0
    %455 = vmatpush1.bf16.msra.mxu0 0
    %456 = vmatprep.subr.bf16.mxu0 0
    %457 = vmatpush1.bf16.msra.mxu0 0
    %458 = vmatprep.mubr.bf16.mxu0 0
    %459 = vmatmul.mubr.bf16.gmra.mrb[0].mxu0 %v415
    %v460 = vpop.f32.mrb[0].mxu0
    %v461 = vadd.f32 %v411, %v460
    %v462 = vpop.f32.mrb[0].mxu0
    %v463 = vpop.f32.mrb[0].mxu0
    %v464 = vadd.f32 %v411, %v463
    %v465 = vpop.f32.mrb[0].mxu0
    %466 = vmatprep.mubr.bf16.mxu0 0
    %467 = vmatmul.mubr.bf16.gmra.mrb[0].mxu0 %v418
    %v468 = vpop.f32.mrb[0].mxu0
    %v469 = vadd.f32 %v411, %v468
    %v470 = vpop.f32.mrb[0].mxu0
    %v471 = vpop.f32.mrb[0].mxu0
    %v472 = vadd.f32 %v411, %v471
    %v473 = vpop.f32.mrb[0].mxu0
    %474 = vmatprep.mubr.bf16.mxu0 0
    %475 = vmatmul.mubr.bf16.gmra.mrb[0].mxu0 %v421
    %v476 = vpop.f32.mrb[0].mxu0
    %v477 = vadd.f32 %v411, %v476
    %v478 = vpop.f32.mrb[0].mxu0
    %v479 = vpop.f32.mrb[0].mxu0
    %v480 = vadd.f32 %v411, %v479
    %v481 = vpop.f32.mrb[0].mxu0
    %482 = vmatprep.mubr.bf16.mxu0 0
    %483 = vmatmul.mubr.bf16.gmra.mrb[0].mxu0 %v424
    %v484 = vpop.f32.mrb[0].mxu0
    %v485 = vadd.f32 %v411, %v484
    %v486 = vpop.f32.mrb[0].mxu0
    %v487 = vpop.f32.mrb[0].mxu0
    %v488 = vadd.f32 %v411, %v487
    %v489 = vpop.f32.mrb[0].mxu0
    %490 = vdwg.mxu0
    %vm491 = vcmask 261120
    %v493 = vsel %vm491, 0, 0
    %495 = vmatprep.subr.bf16.mxu0 0
    %496 = vmatpush1.bf16.msra.mxu0 %v390
    %497 = vmatprep.subr.bf16.mxu0 0
    %498 = vmatpush1.bf16.msra.mxu0 %v391
    %499 = vmatprep.subr.bf16.mxu0 0
    %500 = vmatpush1.bf16.msra.mxu0 0
    %501 = vmatprep.subr.bf16.mxu0 0
    %502 = vmatpush1.bf16.msra.mxu0 0
    %503 = vmatprep.subr.bf16.mxu0 0
    %504 = vmatpush1.bf16.msra.mxu0 0
    %505 = vmatprep.subr.bf16.mxu0 0
    %506 = vmatpush1.bf16.msra.mxu0 0
    %507 = vmatprep.subr.bf16.mxu0 0
    %508 = vmatpush1.bf16.msra.mxu0 0
    %509 = vmatprep.subr.bf16.mxu0 0
    %510 = vmatpush1.bf16.msra.mxu0 0
    %511 = vmatprep.subr.bf16.mxu0 0
    %512 = vmatpush1.bf16.msra.mxu0 0
    %513 = vmatprep.subr.bf16.mxu0 0
    %514 = vmatpush1.bf16.msra.mxu0 0
    %515 = vmatprep.subr.bf16.mxu0 0
    %516 = vmatpush1.bf16.msra.mxu0 0
    %517 = vmatprep.subr.bf16.mxu0 0
    %518 = vmatpush1.bf16.msra.mxu0 0
    %519 = vmatprep.subr.bf16.mxu0 0
    %520 = vmatpush1.bf16.msra.mxu0 0
    %521 = vmatprep.subr.bf16.mxu0 0
    %522 = vmatpush1.bf16.msra.mxu0 0
    %523 = vmatprep.subr.bf16.mxu0 0
    %524 = vmatpush1.bf16.msra.mxu0 0
    %525 = vmatprep.subr.bf16.mxu0 0
    %526 = vmatpush1.bf16.msra.mxu0 0
    %527 = vmatprep.mubr.bf16.mxu0 0
    %528 = vmatmul.mubr.bf16.gmra.mrb[0].mxu0 %v493
    %v529 = vpop.f32.mrb[0].mxu0
    %v530 = vadd.f32 0.0, %v529
    %v531 = vpop.f32.mrb[0].mxu0
    %v532 = vpop.f32.mrb[0].mxu0
    %v533 = vpop.f32.mrb[0].mxu0
    %534 = vdwg.mxu0
    %v535 = vadd.f32 %v461, %v530
    %v536 = vxor.u32 %v535, 2147483648
    %v537 = vmul.f32 %v536, 1.442695
    %v538 = vpow.pop %v537
    %v539 = vadd.f32 %v538, 1.0
    %v540 = vrcp.pop %v539
    %v541 = vmul.f32 1.0, %v540
    %v542 = vtanh.pop %v535
    %v543 = vmul.f32 %v541, 0.0
    %545 = vrot.lane.b32.xlu0 %v542, 64
    %v546 = vpop.permute.xlu0 %545
    %v548 = vmul.f32 %v541, %v546
    %550 = vrot.lane.b32.xlu0 %v548, 32
    %v551 = vpop.permute.xlu0 %550
    %v553 = vadd.f32 %v543, %v551
    %v554 = vtanh.pop %v553
    %556 = vrot.lane.b32.xlu0 %v554, 64
    %v557 = vpop.permute.xlu0 %556
    %v559 = vmul.f32 %v541, %v557
    %561 = vrot.lane.b32.xlu0 %v559, 32
    %v562 = vpop.permute.xlu0 %561
    %564 = vst.msk [vmem:[#allocation13] sm:$0xff] %vm491, %v562
    %v565 = vpack.c.bf16 %v559, %v559
    %567 = vrot.lane.b32.xlu0 %v565, 32
    %v568 = vpop.permute.xlu0 %567
    %v570 = vsel %vm491, %v568, 0
    %572 = vmatprep.subr.bf16.mxu0 0
    %573 = vmatpush1.bf16.msra.mxu0 %v390
    %574 = vmatprep.subr.bf16.mxu0 0
    %575 = vmatpush1.bf16.msra.mxu0 %v391
    %576 = vmatprep.subr.bf16.mxu0 0
    %577 = vmatpush1.bf16.msra.mxu0 0
    %578 = vmatprep.subr.bf16.mxu0 0
    %579 = vmatpush1.bf16.msra.mxu0 0
    %580 = vmatprep.subr.bf16.mxu0 0
    %581 = vmatpush1.bf16.msra.mxu0 0
    %582 = vmatprep.subr.bf16.mxu0 0
    %583 = vmatpush1.bf16.msra.mxu0 0
    %584 = vmatprep.subr.bf16.mxu0 0
    %585 = vmatpush1.bf16.msra.mxu0 0
    %586 = vmatprep.subr.bf16.mxu0 0
    %587 = vmatpush1.bf16.msra.mxu0 0
    %588 = vmatprep.subr.bf16.mxu0 0
    %589 = vmatpush1.bf16.msra.mxu0 0
    %590 = vmatprep.subr.bf16.mxu0 0
    %591 = vmatpush1.bf16.msra.mxu0 0
    %592 = vmatprep.subr.bf16.mxu0 0
    %593 = vmatpush1.bf16.msra.mxu0 0
    %594 = vmatprep.subr.bf16.mxu0 0
    %595 = vmatpush1.bf16.msra.mxu0 0
    %596 = vmatprep.subr.bf16.mxu0 0
    %597 = vmatpush1.bf16.msra.mxu0 0
    %598 = vmatprep.subr.bf16.mxu0 0
    %599 = vmatpush1.bf16.msra.mxu0 0
    %600 = vmatprep.subr.bf16.mxu0 0
    %601 = vmatpush1.bf16.msra.mxu0 0
    %602 = vmatprep.subr.bf16.mxu0 0
    %603 = vmatpush1.bf16.msra.mxu0 0
    %604 = vmatprep.mubr.bf16.mxu0 0
    %605 = vmatmul.mubr.bf16.gmra.mrb[0].mxu0 %v570
    %v606 = vpop.f32.mrb[0].mxu0
    %v607 = vadd.f32 0.0, %v606
    %v608 = vpop.f32.mrb[0].mxu0
    %v609 = vpop.f32.mrb[0].mxu0
    %v610 = vpop.f32.mrb[0].mxu0
    %611 = vdwg.mxu0
    %v612 = vadd.f32 %v464, %v607
    %v613 = vxor.u32 %v612, 2147483648
    %v614 = vmul.f32 %v613, 1.442695
    %v615 = vpow.pop %v614
    %v616 = vadd.f32 %v615, 1.0
    %v617 = vrcp.pop %v616
    %v618 = vmul.f32 1.0, %v617
    %v619 = vtanh.pop %v612
    %v620 = vmul.f32 %v618, %v553
    %622 = vrot.lane.b32.xlu0 %v619, 64
    %v623 = vpop.permute.xlu0 %622
    %v625 = vmul.f32 %v618, %v623
    %627 = vrot.lane.b32.xlu0 %v625, 32
    %v628 = vpop.permute.xlu0 %627
    %v630 = vadd.f32 %v620, %v628
    %v631 = vtanh.pop %v630
    %633 = vrot.lane.b32.xlu0 %v631, 64
    %v634 = vpop.permute.xlu0 %633
    %v636 = vmul.f32 %v618, %v634
    %638 = vrot.lane.b32.xlu0 %v636, 32
    %v639 = vpop.permute.xlu0 %638
    %641 = vst.msk [vmem:[#allocation13 + $0x8] sm:$0xff] %vm491, %v639
    %v642 = vpack.c.bf16 %v636, %v636
    %644 = vrot.lane.b32.xlu0 %v642, 32
    %v645 = vpop.permute.xlu0 %644
    %v647 = vsel %vm491, %v645, 0
    %649 = vmatprep.subr.bf16.mxu0 0
    %650 = vmatpush1.bf16.msra.mxu0 %v390
    %651 = vmatprep.subr.bf16.mxu0 0
    %652 = vmatpush1.bf16.msra.mxu0 %v391
    %653 = vmatprep.subr.bf16.mxu0 0
    %654 = vmatpush1.bf16.msra.mxu0 0
    %655 = vmatprep.subr.bf16.mxu0 0
    %656 = vmatpush1.bf16.msra.mxu0 0
    %657 = vmatprep.subr.bf16.mxu0 0
    %658 = vmatpush1.bf16.msra.mxu0 0
    %659 = vmatprep.subr.bf16.mxu0 0
    %660 = vmatpush1.bf16.msra.mxu0 0
    %661 = vmatprep.subr.bf16.mxu0 0
    %662 = vmatpush1.bf16.msra.mxu0 0
    %663 = vmatprep.subr.bf16.mxu0 0
    %664 = vmatpush1.bf16.msra.mxu0 0
    %665 = vmatprep.subr.bf16.mxu0 0
    %666 = vmatpush1.bf16.msra.mxu0 0
    %667 = vmatprep.subr.bf16.mxu0 0
    %668 = vmatpush1.bf16.msra.mxu0 0
    %669 = vmatprep.subr.bf16.mxu0 0
    %670 = vmatpush1.bf16.msra.mxu0 0
    %671 = vmatprep.subr.bf16.mxu0 0
    %672 = vmatpush1.bf16.msra.mxu0 0
    %673 = vmatprep.subr.bf16.mxu0 0
    %674 = vmatpush1.bf16.msra.mxu0 0
    %675 = vmatprep.subr.bf16.mxu0 0
    %676 = vmatpush1.bf16.msra.mxu0 0
    %677 = vmatprep.subr.bf16.mxu0 0
    %678 = vmatpush1.bf16.msra.mxu0 0
    %679 = vmatprep.subr.bf16.mxu0 0
    %680 = vmatpush1.bf16.msra.mxu0 0
    %681 = vmatprep.mubr.bf16.mxu0 0
    %682 = vmatmul.mubr.bf16.gmra.mrb[0].mxu0 %v647
    %v683 = vpop.f32.mrb[0].mxu0
    %v684 = vadd.f32 0.0, %v683
    %v685 = vpop.f32.mrb[0].mxu0
    %v686 = vpop.f32.mrb[0].mxu0
    %v687 = vpop.f32.mrb[0].mxu0
    %688 = vdwg.mxu0
    %v689 = vadd.f32 %v469, %v684
    %v690 = vxor.u32 %v689, 2147483648
    %v691 = vmul.f32 %v690, 1.442695
    %v692 = vpow.pop %v691
    %v693 = vadd.f32 %v692, 1.0
    %v694 = vrcp.pop %v693
    %v695 = vmul.f32 1.0, %v694
    %v696 = vtanh.pop %v689
    %v697 = vmul.f32 %v695, %v630
    %699 = vrot.lane.b32.xlu0 %v696, 64
    %v700 = vpop.permute.xlu0 %699
    %v702 = vmul.f32 %v695, %v700
    %704 = vrot.lane.b32.xlu0 %v702, 32
    %v705 = vpop.permute.xlu0 %704
    %v707 = vadd.f32 %v697, %v705
    %v708 = vtanh.pop %v707
    %710 = vrot.lane.b32.xlu0 %v708, 64
    %v711 = vpop.permute.xlu0 %710
    %v713 = vmul.f32 %v695, %v711
    %715 = vrot.lane.b32.xlu0 %v713, 32
    %v716 = vpop.permute.xlu0 %715
    %718 = vst.msk [vmem:[#allocation13 + $0x10] sm:$0xff] %vm491, %v716
    %v719 = vpack.c.bf16 %v713, %v713
    %721 = vrot.lane.b32.xlu0 %v719, 32
    %v722 = vpop.permute.xlu0 %721
    %v724 = vsel %vm491, %v722, 0
    %726 = vmatprep.subr.bf16.mxu0 0
    %727 = vmatpush1.bf16.msra.mxu0 %v390
    %728 = vmatprep.subr.bf16.mxu0 0
    %729 = vmatpush1.bf16.msra.mxu0 %v391
    %730 = vmatprep.subr.bf16.mxu0 0
    %731 = vmatpush1.bf16.msra.mxu0 0
    %732 = vmatprep.subr.bf16.mxu0 0
    %733 = vmatpush1.bf16.msra.mxu0 0
    %734 = vmatprep.subr.bf16.mxu0 0
    %735 = vmatpush1.bf16.msra.mxu0 0
    %736 = vmatprep.subr.bf16.mxu0 0
    %737 = vmatpush1.bf16.msra.mxu0 0
    %738 = vmatprep.subr.bf16.mxu0 0
    %739 = vmatpush1.bf16.msra.mxu0 0
    %740 = vmatprep.subr.bf16.mxu0 0
    %741 = vmatpush1.bf16.msra.mxu0 0
    %742 = vmatprep.subr.bf16.mxu0 0
    %743 = vmatpush1.bf16.msra.mxu0 0
    %744 = vmatprep.subr.bf16.mxu0 0
    %745 = vmatpush1.bf16.msra.mxu0 0
    %746 = vmatprep.subr.bf16.mxu0 0
    %747 = vmatpush1.bf16.msra.mxu0 0
    %748 = vmatprep.subr.bf16.mxu0 0
    %749 = vmatpush1.bf16.msra.mxu0 0
    %750 = vmatprep.subr.bf16.mxu0 0
    %751 = vmatpush1.bf16.msra.mxu0 0
    %752 = vmatprep.subr.bf16.mxu0 0
    %753 = vmatpush1.bf16.msra.mxu0 0
    %754 = vmatprep.subr.bf16.mxu0 0
    %755 = vmatpush1.bf16.msra.mxu0 0
    %756 = vmatprep.subr.bf16.mxu0 0
    %757 = vmatpush1.bf16.msra.mxu0 0
    %758 = vmatprep.mubr.bf16.mxu0 0
    %759 = vmatmul.mubr.bf16.gmra.mrb[0].mxu0 %v724
    %v760 = vpop.f32.mrb[0].mxu0
    %v761 = vadd.f32 0.0, %v760
    %v762 = vpop.f32.mrb[0].mxu0
    %v763 = vpop.f32.mrb[0].mxu0
    %v764 = vpop.f32.mrb[0].mxu0
    %765 = vdwg.mxu0
    %v766 = vadd.f32 %v472, %v761
    %v767 = vxor.u32 %v766, 2147483648
    %v768 = vmul.f32 %v767, 1.442695
    %v769 = vpow.pop %v768
    %v770 = vadd.f32 %v769, 1.0
    %v771 = vrcp.pop %v770
    %v772 = vmul.f32 1.0, %v771
    %v773 = vtanh.pop %v766
    %v774 = vmul.f32 %v772, %v707
    %776 = vrot.lane.b32.xlu0 %v773, 64
    %v777 = vpop.permute.xlu0 %776
    %v779 = vmul.f32 %v772, %v777
    %781 = vrot.lane.b32.xlu0 %v779, 32
    %v782 = vpop.permute.xlu0 %781
    %v784 = vadd.f32 %v774, %v782
    %v785 = vtanh.pop %v784
    %787 = vrot.lane.b32.xlu0 %v785, 64
    %v788 = vpop.permute.xlu0 %787
    %v790 = vmul.f32 %v772, %v788
    %792 = vrot.lane.b32.xlu0 %v790, 32
    %v793 = vpop.permute.xlu0 %792
    %795 = vst.msk [vmem:[#allocation13 + $0x18] sm:$0xff] %vm491, %v793
    %v796 = vpack.c.bf16 %v790, %v790
    %798 = vrot.lane.b32.xlu0 %v796, 32
    %v799 = vpop.permute.xlu0 %798
    %v801 = vsel %vm491, %v799, 0
    %803 = vmatprep.subr.bf16.mxu0 0
    %804 = vmatpush1.bf16.msra.mxu0 %v390
    %805 = vmatprep.subr.bf16.mxu0 0
    %806 = vmatpush1.bf16.msra.mxu0 %v391
    %807 = vmatprep.subr.bf16.mxu0 0
    %808 = vmatpush1.bf16.msra.mxu0 0
    %809 = vmatprep.subr.bf16.mxu0 0
    %810 = vmatpush1.bf16.msra.mxu0 0
    %811 = vmatprep.subr.bf16.mxu0 0
    %812 = vmatpush1.bf16.msra.mxu0 0
    %813 = vmatprep.subr.bf16.mxu0 0
    %814 = vmatpush1.bf16.msra.mxu0 0
    %815 = vmatprep.subr.bf16.mxu0 0
    %816 = vmatpush1.bf16.msra.mxu0 0
    %817 = vmatprep.subr.bf16.mxu0 0
    %818 = vmatpush1.bf16.msra.mxu0 0
    %819 = vmatprep.subr.bf16.mxu0 0
    %820 = vmatpush1.bf16.msra.mxu0 0
    %821 = vmatprep.subr.bf16.mxu0 0
    %822 = vmatpush1.bf16.msra.mxu0 0
    %823 = vmatprep.subr.bf16.mxu0 0
    %824 = vmatpush1.bf16.msra.mxu0 0
    %825 = vmatprep.subr.bf16.mxu0 0
    %826 = vmatpush1.bf16.msra.mxu0 0
    %827 = vmatprep.subr.bf16.mxu0 0
    %828 = vmatpush1.bf16.msra.mxu0 0
    %829 = vmatprep.subr.bf16.mxu0 0
    %830 = vmatpush1.bf16.msra.mxu0 0
    %831 = vmatprep.subr.bf16.mxu0 0
    %832 = vmatpush1.bf16.msra.mxu0 0
    %833 = vmatprep.subr.bf16.mxu0 0
    %834 = vmatpush1.bf16.msra.mxu0 0
    %835 = vmatprep.mubr.bf16.mxu0 0
    %836 = vmatmul.mubr.bf16.gmra.mrb[0].mxu0 %v801
    %v837 = vpop.f32.mrb[0].mxu0
    %v838 = vadd.f32 0.0, %v837
    %v839 = vpop.f32.mrb[0].mxu0
    %v840 = vpop.f32.mrb[0].mxu0
    %v841 = vpop.f32.mrb[0].mxu0
    %842 = vdwg.mxu0
    %v843 = vadd.f32 %v477, %v838
    %v844 = vxor.u32 %v843, 2147483648
    %v845 = vmul.f32 %v844, 1.442695
    %v846 = vpow.pop %v845
    %v847 = vadd.f32 %v846, 1.0
    %v848 = vrcp.pop %v847
    %v849 = vmul.f32 1.0, %v848
    %v850 = vtanh.pop %v843
    %v851 = vmul.f32 %v849, %v784
    %853 = vrot.lane.b32.xlu0 %v850, 64
    %v854 = vpop.permute.xlu0 %853
    %v856 = vmul.f32 %v849, %v854
    %858 = vrot.lane.b32.xlu0 %v856, 32
    %v859 = vpop.permute.xlu0 %858
    %v861 = vadd.f32 %v851, %v859
    %v862 = vtanh.pop %v861
    %864 = vrot.lane.b32.xlu0 %v862, 64
    %v865 = vpop.permute.xlu0 %864
    %v867 = vmul.f32 %v849, %v865
    %869 = vrot.lane.b32.xlu0 %v867, 32
    %v870 = vpop.permute.xlu0 %869
    %872 = vst.msk [vmem:[#allocation13 + $0x20] sm:$0xff] %vm491, %v870
    %v873 = vpack.c.bf16 %v867, %v867
    %875 = vrot.lane.b32.xlu0 %v873, 32
    %v876 = vpop.permute.xlu0 %875
    %v878 = vsel %vm491, %v876, 0
    %880 = vmatprep.subr.bf16.mxu0 0
    %881 = vmatpush1.bf16.msra.mxu0 %v390
    %882 = vmatprep.subr.bf16.mxu0 0
    %883 = vmatpush1.bf16.msra.mxu0 %v391
    %884 = vmatprep.subr.bf16.mxu0 0
    %885 = vmatpush1.bf16.msra.mxu0 0
    %886 = vmatprep.subr.bf16.mxu0 0
    %887 = vmatpush1.bf16.msra.mxu0 0
    %888 = vmatprep.subr.bf16.mxu0 0
    %889 = vmatpush1.bf16.msra.mxu0 0
    %890 = vmatprep.subr.bf16.mxu0 0
    %891 = vmatpush1.bf16.msra.mxu0 0
    %892 = vmatprep.subr.bf16.mxu0 0
    %893 = vmatpush1.bf16.msra.mxu0 0
    %894 = vmatprep.subr.bf16.mxu0 0
    %895 = vmatpush1.bf16.msra.mxu0 0
    %896 = vmatprep.subr.bf16.mxu0 0
    %897 = vmatpush1.bf16.msra.mxu0 0
    %898 = vmatprep.subr.bf16.mxu0 0
    %899 = vmatpush1.bf16.msra.mxu0 0
    %900 = vmatprep.subr.bf16.mxu0 0
    %901 = vmatpush1.bf16.msra.mxu0 0
    %902 = vmatprep.subr.bf16.mxu0 0
    %903 = vmatpush1.bf16.msra.mxu0 0
    %904 = vmatprep.subr.bf16.mxu0 0
    %905 = vmatpush1.bf16.msra.mxu0 0
    %906 = vmatprep.subr.bf16.mxu0 0
    %907 = vmatpush1.bf16.msra.mxu0 0
    %908 = vmatprep.subr.bf16.mxu0 0
    %909 = vmatpush1.bf16.msra.mxu0 0
    %910 = vmatprep.subr.bf16.mxu0 0
    %911 = vmatpush1.bf16.msra.mxu0 0
    %912 = vmatprep.mubr.bf16.mxu0 0
    %913 = vmatmul.mubr.bf16.gmra.mrb[0].mxu0 %v878
    %v914 = vpop.f32.mrb[0].mxu0
    %v915 = vadd.f32 0.0, %v914
    %v916 = vpop.f32.mrb[0].mxu0
    %v917 = vpop.f32.mrb[0].mxu0
    %v918 = vpop.f32.mrb[0].mxu0
    %919 = vdwg.mxu0
    %v920 = vadd.f32 %v480, %v915
    %v921 = vxor.u32 %v920, 2147483648
    %v922 = vmul.f32 %v921, 1.442695
    %v923 = vpow.pop %v922
    %v924 = vadd.f32 %v923, 1.0
    %v925 = vrcp.pop %v924
    %v926 = vmul.f32 1.0, %v925
    %v927 = vtanh.pop %v920
    %v928 = vmul.f32 %v926, %v861
    %930 = vrot.lane.b32.xlu0 %v927, 64
    %v931 = vpop.permute.xlu0 %930
    %v933 = vmul.f32 %v926, %v931
    %935 = vrot.lane.b32.xlu0 %v933, 32
    %v936 = vpop.permute.xlu0 %935
    %v938 = vadd.f32 %v928, %v936
    %v939 = vtanh.pop %v938
    %941 = vrot.lane.b32.xlu0 %v939, 64
    %v942 = vpop.permute.xlu0 %941
    %v944 = vmul.f32 %v926, %v942
    %946 = vrot.lane.b32.xlu0 %v944, 32
    %v947 = vpop.permute.xlu0 %946
    %949 = vst.msk [vmem:[#allocation13 + $0x28] sm:$0xff] %vm491, %v947
    %v950 = vpack.c.bf16 %v944, %v944
    %952 = vrot.lane.b32.xlu0 %v950, 32
    %v953 = vpop.permute.xlu0 %952
    %v955 = vsel %vm491, %v953, 0
    %957 = vmatprep.subr.bf16.mxu0 0
    %958 = vmatpush1.bf16.msra.mxu0 %v390
    %959 = vmatprep.subr.bf16.mxu0 0
    %960 = vmatpush1.bf16.msra.mxu0 %v391
    %961 = vmatprep.subr.bf16.mxu0 0
    %962 = vmatpush1.bf16.msra.mxu0 0
    %963 = vmatprep.subr.bf16.mxu0 0
    %964 = vmatpush1.bf16.msra.mxu0 0
    %965 = vmatprep.subr.bf16.mxu0 0
    %966 = vmatpush1.bf16.msra.mxu0 0
    %967 = vmatprep.subr.bf16.mxu0 0
    %968 = vmatpush1.bf16.msra.mxu0 0
    %969 = vmatprep.subr.bf16.mxu0 0
    %970 = vmatpush1.bf16.msra.mxu0 0
    %971 = vmatprep.subr.bf16.mxu0 0
    %972 = vmatpush1.bf16.msra.mxu0 0
    %973 = vmatprep.subr.bf16.mxu0 0
    %974 = vmatpush1.bf16.msra.mxu0 0
    %975 = vmatprep.subr.bf16.mxu0 0
    %976 = vmatpush1.bf16.msra.mxu0 0
    %977 = vmatprep.subr.bf16.mxu0 0
    %978 = vmatpush1.bf16.msra.mxu0 0
    %979 = vmatprep.subr.bf16.mxu0 0
    %980 = vmatpush1.bf16.msra.mxu0 0
    %981 = vmatprep.subr.bf16.mxu0 0
    %982 = vmatpush1.bf16.msra.mxu0 0
    %983 = vmatprep.subr.bf16.mxu0 0
    %984 = vmatpush1.bf16.msra.mxu0 0
    %985 = vmatprep.subr.bf16.mxu0 0
    %986 = vmatpush1.bf16.msra.mxu0 0
    %987 = vmatprep.subr.bf16.mxu0 0
    %988 = vmatpush1.bf16.msra.mxu0 0
    %989 = vmatprep.mubr.bf16.mxu0 0
    %990 = vmatmul.mubr.bf16.gmra.mrb[0].mxu0 %v955
    %v991 = vpop.f32.mrb[0].mxu0
    %v992 = vadd.f32 0.0, %v991
    %v993 = vpop.f32.mrb[0].mxu0
    %v994 = vpop.f32.mrb[0].mxu0
    %v995 = vpop.f32.mrb[0].mxu0
    %996 = vdwg.mxu0
    %v997 = vadd.f32 %v485, %v992
    %v998 = vxor.u32 %v997, 2147483648
    %v999 = vmul.f32 %v998, 1.442695
    %v1000 = vpow.pop %v999
    %v1001 = vadd.f32 %v1000, 1.0
    %v1002 = vrcp.pop %v1001
    %v1003 = vmul.f32 1.0, %v1002
    %v1004 = vtanh.pop %v997
    %v1005 = vmul.f32 %v1003, %v938
    %1007 = vrot.lane.b32.xlu0 %v1004, 64
    %v1008 = vpop.permute.xlu0 %1007
    %v1010 = vmul.f32 %v1003, %v1008
    %1012 = vrot.lane.b32.xlu0 %v1010, 32
    %v1013 = vpop.permute.xlu0 %1012
    %v1015 = vadd.f32 %v1005, %v1013
    %v1016 = vtanh.pop %v1015
    %1018 = vrot.lane.b32.xlu0 %v1016, 64
    %v1019 = vpop.permute.xlu0 %1018
    %v1021 = vmul.f32 %v1003, %v1019
    %1023 = vrot.lane.b32.xlu0 %v1021, 32
    %v1024 = vpop.permute.xlu0 %1023
    %1026 = vst.msk [vmem:[#allocation13 + $0x30] sm:$0xff] %vm491, %v1024
    %v1027 = vpack.c.bf16 %v1021, %v1021
    %1029 = vrot.lane.b32.xlu0 %v1027, 32
    %v1030 = vpop.permute.xlu0 %1029
    %v1032 = vsel %vm491, %v1030, 0
    %1034 = vmatprep.subr.bf16.mxu0 0
    %1035 = vmatpush1.bf16.msra.mxu0 %v390
    %1036 = vmatprep.subr.bf16.mxu0 0
    %1037 = vmatpush1.bf16.msra.mxu0 %v391
    %1038 = vmatprep.subr.bf16.mxu0 0
    %1039 = vmatpush1.bf16.msra.mxu0 0
    %1040 = vmatprep.subr.bf16.mxu0 0
    %1041 = vmatpush1.bf16.msra.mxu0 0
    %1042 = vmatprep.subr.bf16.mxu0 0
    %1043 = vmatpush1.bf16.msra.mxu0 0
    %1044 = vmatprep.subr.bf16.mxu0 0
    %1045 = vmatpush1.bf16.msra.mxu0 0
    %1046 = vmatprep.subr.bf16.mxu0 0
    %1047 = vmatpush1.bf16.msra.mxu0 0
    %1048 = vmatprep.subr.bf16.mxu0 0
    %1049 = vmatpush1.bf16.msra.mxu0 0
    %1050 = vmatprep.subr.bf16.mxu0 0
    %1051 = vmatpush1.bf16.msra.mxu0 0
    %1052 = vmatprep.subr.bf16.mxu0 0
    %1053 = vmatpush1.bf16.msra.mxu0 0
    %1054 = vmatprep.subr.bf16.mxu0 0
    %1055 = vmatpush1.bf16.msra.mxu0 0
    %1056 = vmatprep.subr.bf16.mxu0 0
    %1057 = vmatpush1.bf16.msra.mxu0 0
    %1058 = vmatprep.subr.bf16.mxu0 0
    %1059 = vmatpush1.bf16.msra.mxu0 0
    %1060 = vmatprep.subr.bf16.mxu0 0
    %1061 = vmatpush1.bf16.msra.mxu0 0
    %1062 = vmatprep.subr.bf16.mxu0 0
    %1063 = vmatpush1.bf16.msra.mxu0 0
    %1064 = vmatprep.subr.bf16.mxu0 0
    %1065 = vmatpush1.bf16.msra.mxu0 0
    %1066 = vmatprep.mubr.bf16.mxu0 0
    %1067 = vmatmul.mubr.bf16.gmra.mrb[0].mxu0 %v1032
    %v1068 = vpop.f32.mrb[0].mxu0
    %v1069 = vadd.f32 0.0, %v1068
    %v1070 = vpop.f32.mrb[0].mxu0
    %v1071 = vpop.f32.mrb[0].mxu0
    %v1072 = vpop.f32.mrb[0].mxu0
    %1073 = vdwg.mxu0
    %v1074 = vadd.f32 %v488, %v1069
    %v1075 = vxor.u32 %v1074, 2147483648
    %v1076 = vmul.f32 %v1075, 1.442695
    %v1077 = vpow.pop %v1076
    %v1078 = vadd.f32 %v1077, 1.0
    %v1079 = vrcp.pop %v1078
    %v1080 = vmul.f32 1.0, %v1079
    %v1081 = vtanh.pop %v1074
    %v1082 = vmul.f32 %v1080, %v1015
    %1084 = vrot.lane.b32.xlu0 %v1081, 64
    %v1085 = vpop.permute.xlu0 %1084
    %v1087 = vmul.f32 %v1080, %v1085
    %1089 = vrot.lane.b32.xlu0 %v1087, 32
    %v1090 = vpop.permute.xlu0 %1089
    %v1092 = vadd.f32 %v1082, %v1090
    %v1093 = vtanh.pop %v1092
    %1095 = vrot.lane.b32.xlu0 %v1093, 64
    %v1096 = vpop.permute.xlu0 %1095
    %v1098 = vmul.f32 %v1080, %v1096
    %1100 = vrot.lane.b32.xlu0 %v1098, 32
    %v1101 = vpop.permute.xlu0 %1100
    %1103 = vst.msk [vmem:[#allocation13 + $0x38] sm:$0xff] %vm491, %v1101
    %1104 = vst.msk [vmem:[#allocation14] sm:$0xff] %vm491, %v1101
    %1106 = vrot.lane.b32.xlu0 %v1092, 96
    %v1107 = vpop.permute.xlu0 %1106
    %1109 = vst.msk [vmem:[#allocation16] sm:$0xff] %vm491, %v1107
    // Predicated region
    $region62: #{bayes_rnn_forward.1} parent=1 // pred_check
      _
    $region63: #{bayes_rnn_forward.1} parent=1 // pred_check_branch
      %1111 = sbr.rel (0) target = $region65
    $region64: #{bayes_rnn_forward.1} parent=1 // pred_region
      %s1113 = ssub.s32 1024, 1024
      %1114 = vsyncadd [#allocation4], %s1113
      %s1115 = sshll.u32 [#allocation13], 4
      %s1116 = int_to_ptr.vmem [resolvable:$true] %s1115
      %1121 = dma.vmem_to_hbm [thread:$0]  %s1116, 1024, %s9, [#allocation4], 128, 128, 8
    $region65: #{bayes_rnn_forward.1} parent=1 // pred_fallthru
      _
    // Predicated region
    $region66: #{bayes_rnn_forward.1} parent=1 // pred_check
      _
    $region67: #{bayes_rnn_forward.1} parent=1 // pred_check_branch
      %1123 = sbr.rel (0) target = $region69
    $region68: #{bayes_rnn_forward.1} parent=1 // pred_region
      %s1125 = ssub.s32 128, 128
      %1126 = vsyncadd [#allocation15], %s1125
      %s1128 = sshll.u32 [#allocation14], 4
      %s1129 = int_to_ptr.vmem [resolvable:$true] %s1128
      %1131 = dma.vmem_to_hbm [thread:$0]  %s1129, 128, %s10, [#allocation15]
    $region69: #{bayes_rnn_forward.1} parent=1 // pred_fallthru
      _
    // Predicated region
    $region70: #{bayes_rnn_forward.1} parent=1 // pred_check
      _
    $region71: #{bayes_rnn_forward.1} parent=1 // pred_check_branch
      %1133 = sbr.rel (0) target = $region73
    $region72: #{bayes_rnn_forward.1} parent=1 // pred_region
      %s1135 = ssub.s32 128, 128
      %1136 = vsyncadd [#allocation15], %s1135
      %s1138 = sshll.u32 [#allocation16], 4
      %s1139 = int_to_ptr.vmem [resolvable:$true] %s1138
      %1141 = dma.vmem_to_hbm [thread:$0]  %s1139, 128, %s11, [#allocation15]
    $region73: #{bayes_rnn_forward.1} parent=1 // pred_fallthru
      _
    // Predicated region
    $region74: #{bayes_rnn_forward.1} parent=1 // pred_check
      _
    $region75: #{bayes_rnn_forward.1} parent=1 // pred_check_branch
      %1143 = sbr.rel (0) target = $region77
    $region76: #{bayes_rnn_forward.1} parent=1 // pred_region
      %s1145 = ssub.s32 16, 16
      %1146 = vsyncadd [#allocation18], %s1145
      %s1148 = sshll.u32 [#allocation17], 4
      %s1149 = int_to_ptr.vmem [resolvable:$true] %s1148
      %1151 = dma.vmem_to_hbm [thread:$0]  %s1149, 16, %s12, [#allocation18]
    $region77: #{bayes_rnn_forward.1} parent=1 // pred_fallthru
      _
    // Predicated region
    $region78: #{bayes_rnn_forward.1} parent=1 // pred_check
      _
    $region79: #{bayes_rnn_forward.1} parent=1 // pred_check_branch
      %1153 = sbr.rel (0) target = $region81
    $region80: #{bayes_rnn_forward.1} parent=1 // pred_region
      %1154 = dma.done [#allocation4], 1024
    $region81: #{bayes_rnn_forward.1} parent=1 // pred_fallthru
      _
    // Predicated region
    $region82: #{bayes_rnn_forward.1} parent=1 // pred_check
      _
    $region83: #{bayes_rnn_forward.1} parent=1 // pred_check_branch
      %1156 = sbr.rel (0) target = $region85
    $region84: #{bayes_rnn_forward.1} parent=1 // pred_region
      %1157 = dma.done [#allocation15], 128
    $region85: #{bayes_rnn_forward.1} parent=1 // pred_fallthru
      _
    // Predicated region
    $region86: #{bayes_rnn_forward.1} parent=1 // pred_check
      _
    $region87: #{bayes_rnn_forward.1} parent=1 // pred_check_branch
      %1159 = sbr.rel (0) target = $region89
    $region88: #{bayes_rnn_forward.1} parent=1 // pred_region
      %1160 = dma.done [#allocation15], 128
    $region89: #{bayes_rnn_forward.1} parent=1 // pred_fallthru
      _
    // Predicated region
    $region90: #{bayes_rnn_forward.1} parent=1 // pred_check
      _
    $region91: #{bayes_rnn_forward.1} parent=1 // pred_check_branch
      %1162 = sbr.rel (0) target = $region93
    $region92: #{bayes_rnn_forward.1} parent=1 // pred_region
      %1163 = dma.done [#allocation18], 16
    $region93: #{bayes_rnn_forward.1} parent=1 // pred_fallthru
      _
    %1164 = vsyncpa [#allocation3], 1
    %1165 = vsyncpa [#allocation6], 1
    %1166 = vsyncpa [#allocation9], 1
    %1167 = vsyncpa [#allocation12], 1
    %1168 = vsyncpa [#allocation4], 1
    %1169 = vsyncpa [#allocation15], 1
    %1170 = vsyncpa [#allocation18], 1

</llo_original>
